<compile_context>
chip_gen: v7x
topology: tpu7x:2x2x1
jax: 0.10.0
libtpu: 0.0.40
codegen_flags: <defaults>
</compile_context>

<pallas_src>
import jax
import jax.numpy as jnp
from jax.experimental import pallas as pl
from jax.experimental.pallas import tpu as pltpu

B = 2                       # batch
CIN, COUT, K = 1, 5, 3      # conv: in-channels, out-channels, kernel
H, W = 28, 28               # spatial size forced by fc1 (5*26*26 == 3380)
OH, OW = H - K + 1, W - K + 1   # 26, 26 (VALID conv, stride 1)
FLAT = COUT * OH * OW           # 3380 (torch flatten width)
NCLS = 10                       # fc output features

CSTRIDE = 768                   # per-channel lane stride (6*128, lane-tile aligned)
PACKED = COUT * CSTRIDE         # 3840: packed activation width for the fused dot
XW = 896                        # padded flat-x width (>= 58 + 768, multiple of 128)


def fused_kernel(x_ref, w_ref, b_ref, fcw_ref, fcb_ref, o_ref, acc_ref):
    """x_ref: VMEM [B, 896]  (flattened 28x28 image, zero-padded lanes);
    w_ref:  SMEM [45]  conv weights, OIHW flat;
    b_ref:  SMEM [5]   conv bias;
    fcw_ref: VMEM [10, 3840]  fc1 weights, lane-dense packed/padded order;
    fcb_ref: VMEM [1, 10];
    o_ref:  VMEM [B, 10];
    acc_ref: VMEM scratch [B, 3840] packed ReLU'd conv activations."""
    # Hoisted SMEM scalar reads (cheap, keeps them out of the MAC loop body).
    ws = [w_ref[i] for i in range(COUT * K * K)]
    bs = [b_ref[c] for c in range(COUT)]

    # Tap-outer / channel-inner conv MACs: one [B, 768] window slice live at a
    # time, 5 independent accumulation chains (5-way ILP for the 4 VALU slots).
    accs = [None] * COUT
    for kh in range(K):
        for kw in range(K):
            t = kh * K + kw
            off = kh * W + kw                      # static tap offset (0..58)
            xt = x_ref[:, off: off + CSTRIDE]      # [B, 768] contiguous lane slice
            for c in range(COUT):
                p = xt * ws[c * K * K + t]
                accs[c] = p if t == 0 else accs[c] + p

    # Bias + ReLU, stored into lane-tile-aligned 768-wide channel slots
    # (full-tile unmasked stores; junk lanes are killed by zero FC weights).
    for c in range(COUT):
        acc_ref[:, c * CSTRIDE:(c + 1) * CSTRIDE] = jnp.maximum(
            accs[c] + bs[c], 0.0)

    # Single fused MXU dot: [B, 3840] . [10, 3840]^T -> [B, 10] (f32 accum).
    out = jax.lax.dot_general(
        acc_ref[...], fcw_ref[...],
        dimension_numbers=(((1,), (1,)), ((), ())),
        preferred_element_type=jnp.float32)
    o_ref[...] = out + fcb_ref[...]


def fused_forward(xf, conv_w_flat, conv_b, fcw_packed, fcb2d):
    # Single block, no grid: total VMEM footprint < 1 MB, far below limits on
    # every generation; a grid would only add per-step overhead at this size.
    return pl.pallas_call(
        fused_kernel,
        out_shape=jax.ShapeDtypeStruct((B, NCLS), jnp.float32),
        in_specs=[
            pl.BlockSpec(memory_space=pltpu.MemorySpace.VMEM),   # x (flat, padded)
            pl.BlockSpec(memory_space=pltpu.MemorySpace.SMEM),   # conv weights
            pl.BlockSpec(memory_space=pltpu.MemorySpace.SMEM),   # conv bias
            pl.BlockSpec(memory_space=pltpu.MemorySpace.VMEM),   # fc weights (packed)
            pl.BlockSpec(memory_space=pltpu.MemorySpace.VMEM),   # fc bias
        ],
        out_specs=pl.BlockSpec(memory_space=pltpu.MemorySpace.VMEM),
        scratch_shapes=[pltpu.VMEM((B, PACKED), jnp.float32)],   # packed activations
    )(xf, conv_w_flat, conv_b, fcw_packed, fcb2d)


def prepare_params(conv_w, conv_b, fc_w, fc_b):
    """One-time (init-time) parameter re-layout — hoisted out of the per-call path.

    fc_w: [3380, 10] (== torch fc1.weight.T).  Packed layout:
      Wp[n, c*768 + 28*h + w] = fc_w[c*676 + 26*h + w, n]   for w < 26,
      zero for w in {26, 27} and for lanes 726..767 of each channel block,
    matching the kernel's stride-28 / 768-stride packed activation layout.
    """
    w_flat = conv_w.reshape(COUT * CIN * K * K).astype(jnp.float32)
    fcw = fc_w.reshape(COUT, OH, OW, NCLS).astype(jnp.float32)
    fcw = jnp.pad(fcw, ((0, 0), (0, 0), (0, W - OW), (0, 0)))       # [5, 26, 28, 10]
    fcw = fcw.reshape(COUT, OH * W, NCLS)                           # [5, 728, 10]
    fcw = jnp.pad(fcw, ((0, 0), (0, CSTRIDE - OH * W), (0, 0)))     # [5, 768, 10]
    fcw = fcw.reshape(COUT * CSTRIDE, NCLS).T                       # [10, 3840] lane-dense
    return (w_flat, conv_b.astype(jnp.float32), fcw,
            fc_b.reshape(1, NCLS).astype(jnp.float32))


@jax.jit
def model_forward(x, conv_w_flat, conv_b, fcw_packed, fcb2d):
    # x: [B, 1, 28, 28] NCHW.  Flatten + zero-pad lanes (tiny, data-dependent,
    # so it stays in the per-call path; all weight re-layout is done at init).
    xf = x.reshape(B, H * W)
    xf = jnp.pad(xf, ((0, 0), (0, XW - H * W)))
    return fused_forward(xf, conv_w_flat, conv_b, fcw_packed, fcb2d)


def reference(x, conv_w, conv_b, fc_w, fc_b):
    """Plain-JAX reference reproducing the PyTorch forward."""
    conv = jax.lax.conv_general_dilated(
        x, conv_w, window_strides=(1, 1), padding="VALID",
        dimension_numbers=("NCHW", "OIHW", "NCHW"))
    conv = jnp.maximum(conv + conv_b[None, :, None, None], 0.0)
    return conv.reshape(B, FLAT) @ fc_w + fc_b


if __name__ == "__main__":
    key = jax.random.PRNGKey(0)
    k1, k2, k3, k4, k5 = jax.random.split(key, 5)

    # Deterministic synthetic parameters (shapes from the module __init__).
    x = jax.random.normal(k1, (B, CIN, H, W), jnp.float32)
    conv_w = jax.random.normal(k2, (COUT, CIN, K, K), jnp.float32) * 0.1
    conv_b = jax.random.normal(k3, (COUT,), jnp.float32) * 0.1
    fc_w = jax.random.normal(k4, (FLAT, NCLS), jnp.float32) * 0.02
    fc_b = jax.random.normal(k5, (NCLS,), jnp.float32) * 0.1

    # One-time parameter packing (init-time, outside the jitted forward).
    packed = prepare_params(conv_w, conv_b, fc_w, fc_b)

    out = jax.block_until_ready(model_forward(x, *packed))
    ref = reference(x, conv_w, conv_b, fc_w, fc_b)

    assert out.shape == (B, NCLS), out.shape
    assert jnp.allclose(out, ref, atol=1e-3, rtol=1e-3), (out, ref)
    print("KERNEL_OK")
</pallas_src>

<mosaic_0001>
module attributes {stable_mosaic.version = 11 : i64} {
  func.func @fused_kernel(%arg0: memref<2x896xf32, #tpu.memory_space<vmem>>, %arg1: memref<45xf32, #tpu.memory_space<smem>>, %arg2: memref<5xf32, #tpu.memory_space<smem>>, %arg3: memref<10x3840xf32, #tpu.memory_space<vmem>>, %arg4: memref<1x10xf32, #tpu.memory_space<vmem>>, %arg5: memref<2x10xf32, #tpu.memory_space<vmem>>, %arg6: memref<2x3840xf32, #tpu.memory_space<vmem>>) attributes {dimension_semantics = [], scalar_prefetch = 0 : i64, scratch_operands = 1 : i64, tpu.core_type = #tpu.core_type<tc>} {
    %c0 = arith.constant 0 : index
    %0 = memref.load %arg1[%c0] : memref<45xf32, #tpu.memory_space<smem>>
    %c1 = arith.constant 1 : index
    %1 = memref.load %arg1[%c1] : memref<45xf32, #tpu.memory_space<smem>>
    %c2 = arith.constant 2 : index
    %2 = memref.load %arg1[%c2] : memref<45xf32, #tpu.memory_space<smem>>
    %c3 = arith.constant 3 : index
    %3 = memref.load %arg1[%c3] : memref<45xf32, #tpu.memory_space<smem>>
    %c4 = arith.constant 4 : index
    %4 = memref.load %arg1[%c4] : memref<45xf32, #tpu.memory_space<smem>>
    %c5 = arith.constant 5 : index
    %5 = memref.load %arg1[%c5] : memref<45xf32, #tpu.memory_space<smem>>
    %c6 = arith.constant 6 : index
    %6 = memref.load %arg1[%c6] : memref<45xf32, #tpu.memory_space<smem>>
    %c7 = arith.constant 7 : index
    %7 = memref.load %arg1[%c7] : memref<45xf32, #tpu.memory_space<smem>>
    %c8 = arith.constant 8 : index
    %8 = memref.load %arg1[%c8] : memref<45xf32, #tpu.memory_space<smem>>
    %c9 = arith.constant 9 : index
    %9 = memref.load %arg1[%c9] : memref<45xf32, #tpu.memory_space<smem>>
    %c10 = arith.constant 10 : index
    %10 = memref.load %arg1[%c10] : memref<45xf32, #tpu.memory_space<smem>>
    %c11 = arith.constant 11 : index
    %11 = memref.load %arg1[%c11] : memref<45xf32, #tpu.memory_space<smem>>
    %c12 = arith.constant 12 : index
    %12 = memref.load %arg1[%c12] : memref<45xf32, #tpu.memory_space<smem>>
    %c13 = arith.constant 13 : index
    %13 = memref.load %arg1[%c13] : memref<45xf32, #tpu.memory_space<smem>>
    %c14 = arith.constant 14 : index
    %14 = memref.load %arg1[%c14] : memref<45xf32, #tpu.memory_space<smem>>
    %c15 = arith.constant 15 : index
    %15 = memref.load %arg1[%c15] : memref<45xf32, #tpu.memory_space<smem>>
    %c16 = arith.constant 16 : index
    %16 = memref.load %arg1[%c16] : memref<45xf32, #tpu.memory_space<smem>>
    %c17 = arith.constant 17 : index
    %17 = memref.load %arg1[%c17] : memref<45xf32, #tpu.memory_space<smem>>
    %c18 = arith.constant 18 : index
    %18 = memref.load %arg1[%c18] : memref<45xf32, #tpu.memory_space<smem>>
    %c19 = arith.constant 19 : index
    %19 = memref.load %arg1[%c19] : memref<45xf32, #tpu.memory_space<smem>>
    %c20 = arith.constant 20 : index
    %20 = memref.load %arg1[%c20] : memref<45xf32, #tpu.memory_space<smem>>
    %c21 = arith.constant 21 : index
    %21 = memref.load %arg1[%c21] : memref<45xf32, #tpu.memory_space<smem>>
    %c22 = arith.constant 22 : index
    %22 = memref.load %arg1[%c22] : memref<45xf32, #tpu.memory_space<smem>>
    %c23 = arith.constant 23 : index
    %23 = memref.load %arg1[%c23] : memref<45xf32, #tpu.memory_space<smem>>
    %c24 = arith.constant 24 : index
    %24 = memref.load %arg1[%c24] : memref<45xf32, #tpu.memory_space<smem>>
    %c25 = arith.constant 25 : index
    %25 = memref.load %arg1[%c25] : memref<45xf32, #tpu.memory_space<smem>>
    %c26 = arith.constant 26 : index
    %26 = memref.load %arg1[%c26] : memref<45xf32, #tpu.memory_space<smem>>
    %c27 = arith.constant 27 : index
    %27 = memref.load %arg1[%c27] : memref<45xf32, #tpu.memory_space<smem>>
    %c28 = arith.constant 28 : index
    %28 = memref.load %arg1[%c28] : memref<45xf32, #tpu.memory_space<smem>>
    %c29 = arith.constant 29 : index
    %29 = memref.load %arg1[%c29] : memref<45xf32, #tpu.memory_space<smem>>
    %c30 = arith.constant 30 : index
    %30 = memref.load %arg1[%c30] : memref<45xf32, #tpu.memory_space<smem>>
    %c31 = arith.constant 31 : index
    %31 = memref.load %arg1[%c31] : memref<45xf32, #tpu.memory_space<smem>>
    %c32 = arith.constant 32 : index
    %32 = memref.load %arg1[%c32] : memref<45xf32, #tpu.memory_space<smem>>
    %c33 = arith.constant 33 : index
    %33 = memref.load %arg1[%c33] : memref<45xf32, #tpu.memory_space<smem>>
    %c34 = arith.constant 34 : index
    %34 = memref.load %arg1[%c34] : memref<45xf32, #tpu.memory_space<smem>>
    %c35 = arith.constant 35 : index
    %35 = memref.load %arg1[%c35] : memref<45xf32, #tpu.memory_space<smem>>
    %c36 = arith.constant 36 : index
    %36 = memref.load %arg1[%c36] : memref<45xf32, #tpu.memory_space<smem>>
    %c37 = arith.constant 37 : index
    %37 = memref.load %arg1[%c37] : memref<45xf32, #tpu.memory_space<smem>>
    %c38 = arith.constant 38 : index
    %38 = memref.load %arg1[%c38] : memref<45xf32, #tpu.memory_space<smem>>
    %c39 = arith.constant 39 : index
    %39 = memref.load %arg1[%c39] : memref<45xf32, #tpu.memory_space<smem>>
    %c40 = arith.constant 40 : index
    %40 = memref.load %arg1[%c40] : memref<45xf32, #tpu.memory_space<smem>>
    %c41 = arith.constant 41 : index
    %41 = memref.load %arg1[%c41] : memref<45xf32, #tpu.memory_space<smem>>
    %c42 = arith.constant 42 : index
    %42 = memref.load %arg1[%c42] : memref<45xf32, #tpu.memory_space<smem>>
    %c43 = arith.constant 43 : index
    %43 = memref.load %arg1[%c43] : memref<45xf32, #tpu.memory_space<smem>>
    %c44 = arith.constant 44 : index
    %44 = memref.load %arg1[%c44] : memref<45xf32, #tpu.memory_space<smem>>
    %c0_0 = arith.constant 0 : index
    %45 = memref.load %arg2[%c0_0] : memref<5xf32, #tpu.memory_space<smem>>
    %c1_1 = arith.constant 1 : index
    %46 = memref.load %arg2[%c1_1] : memref<5xf32, #tpu.memory_space<smem>>
    %c2_2 = arith.constant 2 : index
    %47 = memref.load %arg2[%c2_2] : memref<5xf32, #tpu.memory_space<smem>>
    %c3_3 = arith.constant 3 : index
    %48 = memref.load %arg2[%c3_3] : memref<5xf32, #tpu.memory_space<smem>>
    %c4_4 = arith.constant 4 : index
    %49 = memref.load %arg2[%c4_4] : memref<5xf32, #tpu.memory_space<smem>>
    %c0_5 = arith.constant 0 : index
    %c0_6 = arith.constant 0 : index
    %50 = vector.load %arg0[%c0_5, %c0_6] : memref<2x896xf32, #tpu.memory_space<vmem>>, vector<2x768xf32>
    %51 = vector.broadcast %0 : f32 to vector<2x768xf32>
    %52 = arith.mulf %50, %51 : vector<2x768xf32>
    %53 = vector.broadcast %9 : f32 to vector<2x768xf32>
    %54 = arith.mulf %50, %53 : vector<2x768xf32>
    %55 = vector.broadcast %18 : f32 to vector<2x768xf32>
    %56 = arith.mulf %50, %55 : vector<2x768xf32>
    %57 = vector.broadcast %27 : f32 to vector<2x768xf32>
    %58 = arith.mulf %50, %57 : vector<2x768xf32>
    %59 = vector.broadcast %36 : f32 to vector<2x768xf32>
    %60 = arith.mulf %50, %59 : vector<2x768xf32>
    %c0_7 = arith.constant 0 : index
    %c1_8 = arith.constant 1 : index
    %61 = vector.load %arg0[%c0_7, %c1_8] : memref<2x896xf32, #tpu.memory_space<vmem>>, vector<2x768xf32>
    %62 = vector.broadcast %1 : f32 to vector<2x768xf32>
    %63 = arith.mulf %61, %62 : vector<2x768xf32>
    %64 = arith.addf %52, %63 : vector<2x768xf32>
    %65 = vector.broadcast %10 : f32 to vector<2x768xf32>
    %66 = arith.mulf %61, %65 : vector<2x768xf32>
    %67 = arith.addf %54, %66 : vector<2x768xf32>
    %68 = vector.broadcast %19 : f32 to vector<2x768xf32>
    %69 = arith.mulf %61, %68 : vector<2x768xf32>
    %70 = arith.addf %56, %69 : vector<2x768xf32>
    %71 = vector.broadcast %28 : f32 to vector<2x768xf32>
    %72 = arith.mulf %61, %71 : vector<2x768xf32>
    %73 = arith.addf %58, %72 : vector<2x768xf32>
    %74 = vector.broadcast %37 : f32 to vector<2x768xf32>
    %75 = arith.mulf %61, %74 : vector<2x768xf32>
    %76 = arith.addf %60, %75 : vector<2x768xf32>
    %c0_9 = arith.constant 0 : index
    %c2_10 = arith.constant 2 : index
    %77 = vector.load %arg0[%c0_9, %c2_10] : memref<2x896xf32, #tpu.memory_space<vmem>>, vector<2x768xf32>
    %78 = vector.broadcast %2 : f32 to vector<2x768xf32>
    %79 = arith.mulf %77, %78 : vector<2x768xf32>
    %80 = arith.addf %64, %79 : vector<2x768xf32>
    %81 = vector.broadcast %11 : f32 to vector<2x768xf32>
    %82 = arith.mulf %77, %81 : vector<2x768xf32>
    %83 = arith.addf %67, %82 : vector<2x768xf32>
    %84 = vector.broadcast %20 : f32 to vector<2x768xf32>
    %85 = arith.mulf %77, %84 : vector<2x768xf32>
    %86 = arith.addf %70, %85 : vector<2x768xf32>
    %87 = vector.broadcast %29 : f32 to vector<2x768xf32>
    %88 = arith.mulf %77, %87 : vector<2x768xf32>
    %89 = arith.addf %73, %88 : vector<2x768xf32>
    %90 = vector.broadcast %38 : f32 to vector<2x768xf32>
    %91 = arith.mulf %77, %90 : vector<2x768xf32>
    %92 = arith.addf %76, %91 : vector<2x768xf32>
    %c0_11 = arith.constant 0 : index
    %c28_12 = arith.constant 28 : index
    %93 = vector.load %arg0[%c0_11, %c28_12] : memref<2x896xf32, #tpu.memory_space<vmem>>, vector<2x768xf32>
    %94 = vector.broadcast %3 : f32 to vector<2x768xf32>
    %95 = arith.mulf %93, %94 : vector<2x768xf32>
    %96 = arith.addf %80, %95 : vector<2x768xf32>
    %97 = vector.broadcast %12 : f32 to vector<2x768xf32>
    %98 = arith.mulf %93, %97 : vector<2x768xf32>
    %99 = arith.addf %83, %98 : vector<2x768xf32>
    %100 = vector.broadcast %21 : f32 to vector<2x768xf32>
    %101 = arith.mulf %93, %100 : vector<2x768xf32>
    %102 = arith.addf %86, %101 : vector<2x768xf32>
    %103 = vector.broadcast %30 : f32 to vector<2x768xf32>
    %104 = arith.mulf %93, %103 : vector<2x768xf32>
    %105 = arith.addf %89, %104 : vector<2x768xf32>
    %106 = vector.broadcast %39 : f32 to vector<2x768xf32>
    %107 = arith.mulf %93, %106 : vector<2x768xf32>
    %108 = arith.addf %92, %107 : vector<2x768xf32>
    %c0_13 = arith.constant 0 : index
    %c29_14 = arith.constant 29 : index
    %109 = vector.load %arg0[%c0_13, %c29_14] : memref<2x896xf32, #tpu.memory_space<vmem>>, vector<2x768xf32>
    %110 = vector.broadcast %4 : f32 to vector<2x768xf32>
    %111 = arith.mulf %109, %110 : vector<2x768xf32>
    %112 = arith.addf %96, %111 : vector<2x768xf32>
    %113 = vector.broadcast %13 : f32 to vector<2x768xf32>
    %114 = arith.mulf %109, %113 : vector<2x768xf32>
    %115 = arith.addf %99, %114 : vector<2x768xf32>
    %116 = vector.broadcast %22 : f32 to vector<2x768xf32>
    %117 = arith.mulf %109, %116 : vector<2x768xf32>
    %118 = arith.addf %102, %117 : vector<2x768xf32>
    %119 = vector.broadcast %31 : f32 to vector<2x768xf32>
    %120 = arith.mulf %109, %119 : vector<2x768xf32>
    %121 = arith.addf %105, %120 : vector<2x768xf32>
    %122 = vector.broadcast %40 : f32 to vector<2x768xf32>
    %123 = arith.mulf %109, %122 : vector<2x768xf32>
    %124 = arith.addf %108, %123 : vector<2x768xf32>
    %c0_15 = arith.constant 0 : index
    %c30_16 = arith.constant 30 : index
    %125 = vector.load %arg0[%c0_15, %c30_16] : memref<2x896xf32, #tpu.memory_space<vmem>>, vector<2x768xf32>
    %126 = vector.broadcast %5 : f32 to vector<2x768xf32>
    %127 = arith.mulf %125, %126 : vector<2x768xf32>
    %128 = arith.addf %112, %127 : vector<2x768xf32>
    %129 = vector.broadcast %14 : f32 to vector<2x768xf32>
    %130 = arith.mulf %125, %129 : vector<2x768xf32>
    %131 = arith.addf %115, %130 : vector<2x768xf32>
    %132 = vector.broadcast %23 : f32 to vector<2x768xf32>
    %133 = arith.mulf %125, %132 : vector<2x768xf32>
    %134 = arith.addf %118, %133 : vector<2x768xf32>
    %135 = vector.broadcast %32 : f32 to vector<2x768xf32>
    %136 = arith.mulf %125, %135 : vector<2x768xf32>
    %137 = arith.addf %121, %136 : vector<2x768xf32>
    %138 = vector.broadcast %41 : f32 to vector<2x768xf32>
    %139 = arith.mulf %125, %138 : vector<2x768xf32>
    %140 = arith.addf %124, %139 : vector<2x768xf32>
    %c0_17 = arith.constant 0 : index
    %c56 = arith.constant 56 : index
    %141 = vector.load %arg0[%c0_17, %c56] : memref<2x896xf32, #tpu.memory_space<vmem>>, vector<2x768xf32>
    %142 = vector.broadcast %6 : f32 to vector<2x768xf32>
    %143 = arith.mulf %141, %142 : vector<2x768xf32>
    %144 = arith.addf %128, %143 : vector<2x768xf32>
    %145 = vector.broadcast %15 : f32 to vector<2x768xf32>
    %146 = arith.mulf %141, %145 : vector<2x768xf32>
    %147 = arith.addf %131, %146 : vector<2x768xf32>
    %148 = vector.broadcast %24 : f32 to vector<2x768xf32>
    %149 = arith.mulf %141, %148 : vector<2x768xf32>
    %150 = arith.addf %134, %149 : vector<2x768xf32>
    %151 = vector.broadcast %33 : f32 to vector<2x768xf32>
    %152 = arith.mulf %141, %151 : vector<2x768xf32>
    %153 = arith.addf %137, %152 : vector<2x768xf32>
    %154 = vector.broadcast %42 : f32 to vector<2x768xf32>
    %155 = arith.mulf %141, %154 : vector<2x768xf32>
    %156 = arith.addf %140, %155 : vector<2x768xf32>
    %c0_18 = arith.constant 0 : index
    %c57 = arith.constant 57 : index
    %157 = vector.load %arg0[%c0_18, %c57] : memref<2x896xf32, #tpu.memory_space<vmem>>, vector<2x768xf32>
    %158 = vector.broadcast %7 : f32 to vector<2x768xf32>
    %159 = arith.mulf %157, %158 : vector<2x768xf32>
    %160 = arith.addf %144, %159 : vector<2x768xf32>
    %161 = vector.broadcast %16 : f32 to vector<2x768xf32>
    %162 = arith.mulf %157, %161 : vector<2x768xf32>
    %163 = arith.addf %147, %162 : vector<2x768xf32>
    %164 = vector.broadcast %25 : f32 to vector<2x768xf32>
    %165 = arith.mulf %157, %164 : vector<2x768xf32>
    %166 = arith.addf %150, %165 : vector<2x768xf32>
    %167 = vector.broadcast %34 : f32 to vector<2x768xf32>
    %168 = arith.mulf %157, %167 : vector<2x768xf32>
    %169 = arith.addf %153, %168 : vector<2x768xf32>
    %170 = vector.broadcast %43 : f32 to vector<2x768xf32>
    %171 = arith.mulf %157, %170 : vector<2x768xf32>
    %172 = arith.addf %156, %171 : vector<2x768xf32>
    %c0_19 = arith.constant 0 : index
    %c58 = arith.constant 58 : index
    %173 = vector.load %arg0[%c0_19, %c58] : memref<2x896xf32, #tpu.memory_space<vmem>>, vector<2x768xf32>
    %174 = vector.broadcast %8 : f32 to vector<2x768xf32>
    %175 = arith.mulf %173, %174 : vector<2x768xf32>
    %176 = arith.addf %160, %175 : vector<2x768xf32>
    %177 = vector.broadcast %17 : f32 to vector<2x768xf32>
    %178 = arith.mulf %173, %177 : vector<2x768xf32>
    %179 = arith.addf %163, %178 : vector<2x768xf32>
    %180 = vector.broadcast %26 : f32 to vector<2x768xf32>
    %181 = arith.mulf %173, %180 : vector<2x768xf32>
    %182 = arith.addf %166, %181 : vector<2x768xf32>
    %183 = vector.broadcast %35 : f32 to vector<2x768xf32>
    %184 = arith.mulf %173, %183 : vector<2x768xf32>
    %185 = arith.addf %169, %184 : vector<2x768xf32>
    %186 = vector.broadcast %44 : f32 to vector<2x768xf32>
    %187 = arith.mulf %173, %186 : vector<2x768xf32>
    %188 = arith.addf %172, %187 : vector<2x768xf32>
    %189 = vector.broadcast %45 : f32 to vector<2x768xf32>
    %190 = arith.addf %176, %189 : vector<2x768xf32>
    %cst = arith.constant 0.000000e+00 : f32
    %191 = vector.broadcast %cst : f32 to vector<2x768xf32>
    %192 = arith.maximumf %190, %191 : vector<2x768xf32>
    %c0_20 = arith.constant 0 : index
    %c0_21 = arith.constant 0 : index
    %193 = vector.load %arg6[%c0_20, %c0_21] : memref<2x3840xf32, #tpu.memory_space<vmem>>, vector<2x768xf32>
    tpu.vector_store %arg6[%c0_20, %c0_21], %192 {strides = array<i32>} : memref<2x3840xf32, #tpu.memory_space<vmem>>, vector<2x768xf32>,
    %194 = vector.broadcast %46 : f32 to vector<2x768xf32>
    %195 = arith.addf %179, %194 : vector<2x768xf32>
    %cst_22 = arith.constant 0.000000e+00 : f32
    %196 = vector.broadcast %cst_22 : f32 to vector<2x768xf32>
    %197 = arith.maximumf %195, %196 : vector<2x768xf32>
    %c0_23 = arith.constant 0 : index
    %c768 = arith.constant 768 : index
    %198 = vector.load %arg6[%c0_23, %c768] : memref<2x3840xf32, #tpu.memory_space<vmem>>, vector<2x768xf32>
    tpu.vector_store %arg6[%c0_23, %c768], %197 {strides = array<i32>} : memref<2x3840xf32, #tpu.memory_space<vmem>>, vector<2x768xf32>,
    %199 = vector.broadcast %47 : f32 to vector<2x768xf32>
    %200 = arith.addf %182, %199 : vector<2x768xf32>
    %cst_24 = arith.constant 0.000000e+00 : f32
    %201 = vector.broadcast %cst_24 : f32 to vector<2x768xf32>
    %202 = arith.maximumf %200, %201 : vector<2x768xf32>
    %c0_25 = arith.constant 0 : index
    %c1536 = arith.constant 1536 : index
    %203 = vector.load %arg6[%c0_25, %c1536] : memref<2x3840xf32, #tpu.memory_space<vmem>>, vector<2x768xf32>
    tpu.vector_store %arg6[%c0_25, %c1536], %202 {strides = array<i32>} : memref<2x3840xf32, #tpu.memory_space<vmem>>, vector<2x768xf32>,
    %204 = vector.broadcast %48 : f32 to vector<2x768xf32>
    %205 = arith.addf %185, %204 : vector<2x768xf32>
    %cst_26 = arith.constant 0.000000e+00 : f32
    %206 = vector.broadcast %cst_26 : f32 to vector<2x768xf32>
    %207 = arith.maximumf %205, %206 : vector<2x768xf32>
    %c0_27 = arith.constant 0 : index
    %c2304 = arith.constant 2304 : index
    %208 = vector.load %arg6[%c0_27, %c2304] : memref<2x3840xf32, #tpu.memory_space<vmem>>, vector<2x768xf32>
    tpu.vector_store %arg6[%c0_27, %c2304], %207 {strides = array<i32>} : memref<2x3840xf32, #tpu.memory_space<vmem>>, vector<2x768xf32>,
    %209 = vector.broadcast %49 : f32 to vector<2x768xf32>
    %210 = arith.addf %188, %209 : vector<2x768xf32>
    %cst_28 = arith.constant 0.000000e+00 : f32
    %211 = vector.broadcast %cst_28 : f32 to vector<2x768xf32>
    %212 = arith.maximumf %210, %211 : vector<2x768xf32>
    %c0_29 = arith.constant 0 : index
    %c3072 = arith.constant 3072 : index
    %213 = vector.load %arg6[%c0_29, %c3072] : memref<2x3840xf32, #tpu.memory_space<vmem>>, vector<2x768xf32>
    tpu.vector_store %arg6[%c0_29, %c3072], %212 {strides = array<i32>} : memref<2x3840xf32, #tpu.memory_space<vmem>>, vector<2x768xf32>,
    %c0_30 = arith.constant 0 : index
    %c0_31 = arith.constant 0 : index
    %214 = vector.load %arg6[%c0_30, %c0_31] : memref<2x3840xf32, #tpu.memory_space<vmem>>, vector<2x3840xf32>
    %c0_32 = arith.constant 0 : index
    %c0_33 = arith.constant 0 : index
    %215 = vector.load %arg3[%c0_32, %c0_33] : memref<10x3840xf32, #tpu.memory_space<vmem>>, vector<10x3840xf32>
    %cst_34 = arith.constant dense<0.000000e+00> : vector<2x10xf32>
    %216 = tpu.matmul %214, %215, %cst_34 {dimension_numbers = #tpu.dot_dimension_numbers<[1], [1], [0], [0], [0, 0, 1, 0], [], []>} : vector<2x3840xf32>, vector<10x3840xf32>, vector<2x10xf32> -> vector<2x10xf32>
    %c0_35 = arith.constant 0 : index
    %c0_36 = arith.constant 0 : index
    %217 = vector.load %arg4[%c0_35, %c0_36] : memref<1x10xf32, #tpu.memory_space<vmem>>, vector<1x10xf32>
    %218 = vector.broadcast %217 : vector<1x10xf32> to vector<2x10xf32>
    %219 = arith.addf %216, %218 : vector<2x10xf32>
    %c0_37 = arith.constant 0 : index
    %c0_38 = arith.constant 0 : index
    %220 = vector.load %arg5[%c0_37, %c0_38] : memref<2x10xf32, #tpu.memory_space<vmem>>, vector<2x10xf32>
    tpu.vector_store %arg5[%c0_37, %c0_38], %219 {strides = array<i32>} : memref<2x10xf32, #tpu.memory_space<vmem>>, vector<2x10xf32>,
    return
  }
}

</mosaic_0001>

<llo_original>
// kernel: model_forward.1
$region0: #{model_forward.1}
  #allocation0 [shape = 'u32[]', space=smem, size = 0x4, offset = 0x4, fixed_abs, tag = 'smem constant byte address 0x4 - core index']
  #allocation1 [shape = 'u32[144,128]{1,0:T(1,128)}', space=vmem, size = 0x12000, scoped, tag = 'internal scratch']
  #allocation2 [shape = 'f32[2,3840]{1,0:T(2,128)}', space=vmem, size = 0x7800, scoped, tag = 'scratch operand']
  %s0 = inlined_call_operand.vmem [shape: f32[2,896], index: 0, kind: input, shape index: {}]
  %s1 = inlined_call_operand.vmem [shape: f32[45], index: 1, kind: input, shape index: {}]
  %s2 = inlined_call_operand.vmem [shape: f32[5], index: 2, kind: input, shape index: {}]
  %s3 = inlined_call_operand.hbm [shape: f32[10,3840], index: 3, kind: input, shape index: {}]
  %s4 = inlined_call_operand.vmem [shape: f32[1,10], index: 4, kind: input, shape index: {}]
  %s5 = inlined_call_operand.hbm [shape: f32[2,10], index: 5, kind: output, shape index: {}]
  %s6 = sld [smem:[#allocation0]]
  $region42: #{model_forward.1} parent=0
    _
  %s8 = ssub.s32 1, %s6
  %s9 = scalar_select 0, %s8, %s6
  $region1: #{model_forward.1} parent=0
    #allocation3 [shape = 'u8[512]{0}', space=smem, size = 0x200, scoped, tag = 'input window, operand 1, single buffered']
    #allocation4 [shape = 's32[1]{0}', space=sflag, size = 0x4, scoped, tag = 'scoped memory for model_forward.1']
    #allocation5 [shape = 's32[1]{0}', space=sflag, size = 0x4, scoped, tag = 'scoped memory for model_forward.1']
    #allocation6 [shape = 's32[1]{0}', space=sflag, size = 0x4, scoped, tag = 'scoped memory for model_forward.1']
    #allocation7 [shape = 'u8[512]{0}', space=smem, size = 0x200, scoped, tag = 'input window, operand 2, single buffered']
    #allocation8 [shape = 's32[1]{0}', space=sflag, size = 0x4, scoped, tag = 'scoped memory for model_forward.1']
    #allocation9 [shape = 'u8[245760]{0}', space=vmem, size = 0x3c000, scoped, tag = 'input window, operand 3, single buffered']
    #allocation10 [shape = 'u8[1024]{0}', space=vmem, size = 0x400, scoped, tag = 'output window, operand 0, single buffered']
    %10 = vsyncpa [#allocation6], 0
    %11 = vsyncpa [#allocation8], 0
    %12 = vsyncpa [#allocation4], 0
    %13 = vsyncpa [#allocation5], 0
    // Predicated region
    $region2: #{model_forward.1} parent=1 // pred_check
      _
    $region3: #{model_forward.1} parent=1 // pred_check_branch
      %15 = sbr.rel (0) target = $region5
    $region4: #{model_forward.1} parent=1 // pred_region
      _
    $region5: #{model_forward.1} parent=1 // pred_fallthru
      _
    // Predicated region
    $region6: #{model_forward.1} parent=1 // pred_check
      _
    $region7: #{model_forward.1} parent=1 // pred_check_branch
      %17 = sbr.rel (0) target = $region9
    $region8: #{model_forward.1} parent=1 // pred_region
      %s19 = ssub.s32 16, 16
      %20 = vsyncadd [#allocation6], %s19
      %s22 = sshll.u32 %s1, 4
      %s23 = int_to_ptr.vmem [resolvable:$true] %s22
      %25 = dma.vmem_to_smem %s23, 16, [#allocation3], [#allocation6]
    $region9: #{model_forward.1} parent=1 // pred_fallthru
      _
    // Predicated region
    $region10: #{model_forward.1} parent=1 // pred_check
      _
    $region11: #{model_forward.1} parent=1 // pred_check_branch
      %27 = sbr.rel (0) target = $region13
    $region12: #{model_forward.1} parent=1 // pred_region
      %s29 = ssub.s32 16, 16
      %30 = vsyncadd [#allocation8], %s29
      %s32 = sshll.u32 %s2, 4
      %s33 = int_to_ptr.vmem [resolvable:$true] %s32
      %35 = dma.vmem_to_smem %s33, 16, [#allocation7], [#allocation8]
    $region13: #{model_forward.1} parent=1 // pred_fallthru
      _
    // Predicated region
    $region14: #{model_forward.1} parent=1 // pred_check
      _
    $region15: #{model_forward.1} parent=1 // pred_check_branch
      %37 = sbr.rel (0) target = $region17
    $region16: #{model_forward.1} parent=1 // pred_region
      %s39 = ssub.s32 7680, 7680
      %40 = vsyncadd [#allocation4], %s39
      %s41 = sshll.u32 [#allocation9], 4
      %s42 = int_to_ptr.vmem [resolvable:$true] %s41
      %47 = dma.hbm_to_vmem [thread:$0]  %s3, 7680, %s42, [#allocation4], 3840, 3840, 240
    $region17: #{model_forward.1} parent=1 // pred_fallthru
      _
    // Predicated region
    $region18: #{model_forward.1} parent=1 // pred_check
      _
    $region19: #{model_forward.1} parent=1 // pred_check_branch
      %49 = sbr.rel (0) target = $region21
    $region20: #{model_forward.1} parent=1 // pred_region
      _
    $region21: #{model_forward.1} parent=1 // pred_fallthru
      _
    // Predicated region
    $region22: #{model_forward.1} parent=1 // pred_check
      _
    $region23: #{model_forward.1} parent=1 // pred_check_branch
      %51 = sbr.rel (0) target = $region25
    $region24: #{model_forward.1} parent=1 // pred_region
      %52 = dma.done [#allocation6], 16
    $region25: #{model_forward.1} parent=1 // pred_fallthru
      _
    // Predicated region
    $region26: #{model_forward.1} parent=1 // pred_check
      _
    $region27: #{model_forward.1} parent=1 // pred_check_branch
      %54 = sbr.rel (0) target = $region29
    $region28: #{model_forward.1} parent=1 // pred_region
      %55 = dma.done [#allocation8], 16
    $region29: #{model_forward.1} parent=1 // pred_fallthru
      _
    // Predicated region
    $region30: #{model_forward.1} parent=1 // pred_check
      _
    $region31: #{model_forward.1} parent=1 // pred_check_branch
      %57 = sbr.rel (0) target = $region33
    $region32: #{model_forward.1} parent=1 // pred_region
      %58 = dma.done [#allocation4], 7680
    $region33: #{model_forward.1} parent=1 // pred_fallthru
      _
    %59 = sfence
    %s60 = sld [smem:[#allocation3]]
    %s61 = sld [smem:[#allocation3 + $0x1]]
    %s62 = sld [smem:[#allocation3 + $0x2]]
    %s63 = sld [smem:[#allocation3 + $0x3]]
    %s64 = sld [smem:[#allocation3 + $0x4]]
    %s65 = sld [smem:[#allocation3 + $0x5]]
    %s66 = sld [smem:[#allocation3 + $0x6]]
    %s67 = sld [smem:[#allocation3 + $0x7]]
    %s68 = sld [smem:[#allocation3 + $0x8]]
    %s69 = sld [smem:[#allocation3 + $0x9]]
    %s70 = sld [smem:[#allocation3 + $0xa]]
    %s71 = sld [smem:[#allocation3 + $0xb]]
    %s72 = sld [smem:[#allocation3 + $0xc]]
    %s73 = sld [smem:[#allocation3 + $0xd]]
    %s74 = sld [smem:[#allocation3 + $0xe]]
    %s75 = sld [smem:[#allocation3 + $0xf]]
    %s76 = sld [smem:[#allocation3 + $0x10]]
    %s77 = sld [smem:[#allocation3 + $0x11]]
    %s78 = sld [smem:[#allocation3 + $0x12]]
    %s79 = sld [smem:[#allocation3 + $0x13]]
    %s80 = sld [smem:[#allocation3 + $0x14]]
    %s81 = sld [smem:[#allocation3 + $0x15]]
    %s82 = sld [smem:[#allocation3 + $0x16]]
    %s83 = sld [smem:[#allocation3 + $0x17]]
    %s84 = sld [smem:[#allocation3 + $0x18]]
    %s85 = sld [smem:[#allocation3 + $0x19]]
    %s86 = sld [smem:[#allocation3 + $0x1a]]
    %s87 = sld [smem:[#allocation3 + $0x1b]]
    %s88 = sld [smem:[#allocation3 + $0x1c]]
    %s89 = sld [smem:[#allocation3 + $0x1d]]
    %s90 = sld [smem:[#allocation3 + $0x1e]]
    %s91 = sld [smem:[#allocation3 + $0x1f]]
    %s92 = sld [smem:[#allocation3 + $0x20]]
    %s93 = sld [smem:[#allocation3 + $0x21]]
    %s94 = sld [smem:[#allocation3 + $0x22]]
    %s95 = sld [smem:[#allocation3 + $0x23]]
    %s96 = sld [smem:[#allocation3 + $0x24]]
    %s97 = sld [smem:[#allocation3 + $0x25]]
    %s98 = sld [smem:[#allocation3 + $0x26]]
    %s99 = sld [smem:[#allocation3 + $0x27]]
    %s100 = sld [smem:[#allocation3 + $0x28]]
    %s101 = sld [smem:[#allocation3 + $0x29]]
    %s102 = sld [smem:[#allocation3 + $0x2a]]
    %s103 = sld [smem:[#allocation3 + $0x2b]]
    %s104 = sld [smem:[#allocation3 + $0x2c]]
    %s105 = sld [smem:[#allocation7]]
    %s106 = sld [smem:[#allocation7 + $0x1]]
    %s107 = sld [smem:[#allocation7 + $0x2]]
    %s108 = sld [smem:[#allocation7 + $0x3]]
    %s109 = sld [smem:[#allocation7 + $0x4]]
    %v110 = vld [vmem:[%s0] sm:$0xff]
    %v111 = vld [vmem:[%s0 + $0x8] sm:$0xf]
    %v112 = vstv %s60
    %v113 = vmul.f32 %v110, %v112
    %v114 = vmul.f32 %v111, %v112
    %v115 = vstv %s69
    %v116 = vmul.f32 %v110, %v115
    %v117 = vmul.f32 %v111, %v115
    %v118 = vstv %s78
    %v119 = vmul.f32 %v110, %v118
    %v120 = vmul.f32 %v111, %v118
    %v121 = vstv %s87
    %v122 = vmul.f32 %v110, %v121
    %v123 = vmul.f32 %v111, %v121
    %v124 = vstv %s96
    %v125 = vmul.f32 %v110, %v124
    %v126 = vmul.f32 %v111, %v124
    %v127 = vld [vmem:[%s0] sm:$0xff]
    %v128 = vld [vmem:[%s0 + $0x8] sm:$0x3f]
    %v129 = vstv %s61
    %v130 = vmul.f32 %v127, %v129
    %v131 = vmul.f32 %v128, %v129
    %134 = vrot.lane.b32.xlu0 %v130, 127
    %v135 = vpop.permute.xlu0 %134
    %136 = vrot.lane.b32.xlu0 %v131, 127
    %v137 = vpop.permute.xlu0 %136
    %v138 = vrot.slane %v135, 2
    %v139 = vrot.slane %v137, 2
    %vm140 = vcmask 1045504
    %v141 = vsel %vm140, %v138, %v139
    %vm142 = vcmask 1039360
    %v143 = vsel %vm142, %v135, %v141
    %v144 = vsel %vm142, %v137, %v139
    %v147 = vadd.f32 %v113, %v143
    %v148 = vadd.f32 %v114, %v144
    %v149 = vstv %s70
    %v150 = vmul.f32 %v127, %v149
    %v151 = vmul.f32 %v128, %v149
    %154 = vrot.lane.b32.xlu0 %v150, 127
    %v155 = vpop.permute.xlu0 %154
    %156 = vrot.lane.b32.xlu0 %v151, 127
    %v157 = vpop.permute.xlu0 %156
    %v158 = vrot.slane %v155, 2
    %v159 = vrot.slane %v157, 2
    %v160 = vsel %vm140, %v158, %v159
    %v161 = vsel %vm142, %v155, %v160
    %v162 = vsel %vm142, %v157, %v159
    %v165 = vadd.f32 %v116, %v161
    %v166 = vadd.f32 %v117, %v162
    %v167 = vstv %s79
    %v168 = vmul.f32 %v127, %v167
    %v169 = vmul.f32 %v128, %v167
    %172 = vrot.lane.b32.xlu0 %v168, 127
    %v173 = vpop.permute.xlu0 %172
    %174 = vrot.lane.b32.xlu0 %v169, 127
    %v175 = vpop.permute.xlu0 %174
    %v176 = vrot.slane %v173, 2
    %v177 = vrot.slane %v175, 2
    %v178 = vsel %vm140, %v176, %v177
    %v179 = vsel %vm142, %v173, %v178
    %v180 = vsel %vm142, %v175, %v177
    %v183 = vadd.f32 %v119, %v179
    %v184 = vadd.f32 %v120, %v180
    %v185 = vstv %s88
    %v186 = vmul.f32 %v127, %v185
    %v187 = vmul.f32 %v128, %v185
    %190 = vrot.lane.b32.xlu0 %v186, 127
    %v191 = vpop.permute.xlu0 %190
    %192 = vrot.lane.b32.xlu0 %v187, 127
    %v193 = vpop.permute.xlu0 %192
    %v194 = vrot.slane %v191, 2
    %v195 = vrot.slane %v193, 2
    %v196 = vsel %vm140, %v194, %v195
    %v197 = vsel %vm142, %v191, %v196
    %v198 = vsel %vm142, %v193, %v195
    %v201 = vadd.f32 %v122, %v197
    %v202 = vadd.f32 %v123, %v198
    %v203 = vstv %s97
    %v204 = vmul.f32 %v127, %v203
    %v205 = vmul.f32 %v128, %v203
    %208 = vrot.lane.b32.xlu0 %v204, 127
    %v209 = vpop.permute.xlu0 %208
    %210 = vrot.lane.b32.xlu0 %v205, 127
    %v211 = vpop.permute.xlu0 %210
    %v212 = vrot.slane %v209, 2
    %v213 = vrot.slane %v211, 2
    %v214 = vsel %vm140, %v212, %v213
    %v215 = vsel %vm142, %v209, %v214
    %v216 = vsel %vm142, %v211, %v213
    %v219 = vadd.f32 %v125, %v215
    %v220 = vadd.f32 %v126, %v216
    %v221 = vstv %s62
    %v222 = vmul.f32 %v127, %v221
    %v223 = vmul.f32 %v128, %v221
    %226 = vrot.lane.b32.xlu0 %v222, 126
    %v227 = vpop.permute.xlu0 %226
    %228 = vrot.lane.b32.xlu0 %v223, 126
    %v229 = vpop.permute.xlu0 %228
    %v230 = vrot.slane %v227, 2
    %v231 = vrot.slane %v229, 2
    %v232 = vsel %vm140, %v230, %v231
    %vm233 = vcmask 1031168
    %v234 = vsel %vm233, %v227, %v232
    %v235 = vsel %vm233, %v229, %v231
    %v238 = vadd.f32 %v147, %v234
    %v239 = vadd.f32 %v148, %v235
    %v240 = vstv %s71
    %v241 = vmul.f32 %v127, %v240
    %v242 = vmul.f32 %v128, %v240
    %245 = vrot.lane.b32.xlu0 %v241, 126
    %v246 = vpop.permute.xlu0 %245
    %247 = vrot.lane.b32.xlu0 %v242, 126
    %v248 = vpop.permute.xlu0 %247
    %v249 = vrot.slane %v246, 2
    %v250 = vrot.slane %v248, 2
    %v251 = vsel %vm140, %v249, %v250
    %v252 = vsel %vm233, %v246, %v251
    %v253 = vsel %vm233, %v248, %v250
    %v256 = vadd.f32 %v165, %v252
    %v257 = vadd.f32 %v166, %v253
    %v258 = vstv %s80
    %v259 = vmul.f32 %v127, %v258
    %v260 = vmul.f32 %v128, %v258
    %263 = vrot.lane.b32.xlu0 %v259, 126
    %v264 = vpop.permute.xlu0 %263
    %265 = vrot.lane.b32.xlu0 %v260, 126
    %v266 = vpop.permute.xlu0 %265
    %v267 = vrot.slane %v264, 2
    %v268 = vrot.slane %v266, 2
    %v269 = vsel %vm140, %v267, %v268
    %v270 = vsel %vm233, %v264, %v269
    %v271 = vsel %vm233, %v266, %v268
    %v274 = vadd.f32 %v183, %v270
    %v275 = vadd.f32 %v184, %v271
    %v276 = vstv %s89
    %v277 = vmul.f32 %v127, %v276
    %v278 = vmul.f32 %v128, %v276
    %281 = vrot.lane.b32.xlu0 %v277, 126
    %v282 = vpop.permute.xlu0 %281
    %283 = vrot.lane.b32.xlu0 %v278, 126
    %v284 = vpop.permute.xlu0 %283
    %v285 = vrot.slane %v282, 2
    %v286 = vrot.slane %v284, 2
    %v287 = vsel %vm140, %v285, %v286
    %v288 = vsel %vm233, %v282, %v287
    %v289 = vsel %vm233, %v284, %v286
    %v292 = vadd.f32 %v201, %v288
    %v293 = vadd.f32 %v202, %v289
    %v294 = vstv %s98
    %v295 = vmul.f32 %v127, %v294
    %v296 = vmul.f32 %v128, %v294
    %299 = vrot.lane.b32.xlu0 %v295, 126
    %v300 = vpop.permute.xlu0 %299
    %301 = vrot.lane.b32.xlu0 %v296, 126
    %v302 = vpop.permute.xlu0 %301
    %v303 = vrot.slane %v300, 2
    %v304 = vrot.slane %v302, 2
    %v305 = vsel %vm140, %v303, %v304
    %v306 = vsel %vm233, %v300, %v305
    %v307 = vsel %vm233, %v302, %v304
    %v310 = vadd.f32 %v219, %v306
    %v311 = vadd.f32 %v220, %v307
    %v312 = vstv %s63
    %v313 = vmul.f32 %v127, %v312
    %v314 = vmul.f32 %v128, %v312
    %317 = vrot.lane.b32.xlu0 %v313, 100
    %v318 = vpop.permute.xlu0 %317
    %319 = vrot.lane.b32.xlu0 %v314, 100
    %v320 = vpop.permute.xlu0 %319
    %v321 = vrot.slane %v318, 2
    %v322 = vrot.slane %v320, 2
    %v323 = vsel %vm140, %v321, %v322
    %vm324 = vcmask 818176
    %v325 = vsel %vm324, %v318, %v323
    %v326 = vsel %vm324, %v320, %v322
    %v329 = vadd.f32 %v238, %v325
    %v330 = vadd.f32 %v239, %v326
    %v331 = vstv %s72
    %v332 = vmul.f32 %v127, %v331
    %v333 = vmul.f32 %v128, %v331
    %336 = vrot.lane.b32.xlu0 %v332, 100
    %v337 = vpop.permute.xlu0 %336
    %338 = vrot.lane.b32.xlu0 %v333, 100
    %v339 = vpop.permute.xlu0 %338
    %v340 = vrot.slane %v337, 2
    %v341 = vrot.slane %v339, 2
    %v342 = vsel %vm140, %v340, %v341
    %v343 = vsel %vm324, %v337, %v342
    %v344 = vsel %vm324, %v339, %v341
    %v347 = vadd.f32 %v256, %v343
    %v348 = vadd.f32 %v257, %v344
    %v349 = vstv %s81
    %v350 = vmul.f32 %v127, %v349
    %v351 = vmul.f32 %v128, %v349
    %354 = vrot.lane.b32.xlu0 %v350, 100
    %v355 = vpop.permute.xlu0 %354
    %356 = vrot.lane.b32.xlu0 %v351, 100
    %v357 = vpop.permute.xlu0 %356
    %v358 = vrot.slane %v355, 2
    %v359 = vrot.slane %v357, 2
    %v360 = vsel %vm140, %v358, %v359
    %v361 = vsel %vm324, %v355, %v360
    %v362 = vsel %vm324, %v357, %v359
    %v365 = vadd.f32 %v274, %v361
    %v366 = vadd.f32 %v275, %v362
    %v367 = vstv %s90
    %v368 = vmul.f32 %v127, %v367
    %v369 = vmul.f32 %v128, %v367
    %372 = vrot.lane.b32.xlu0 %v368, 100
    %v373 = vpop.permute.xlu0 %372
    %374 = vrot.lane.b32.xlu0 %v369, 100
    %v375 = vpop.permute.xlu0 %374
    %v376 = vrot.slane %v373, 2
    %v377 = vrot.slane %v375, 2
    %v378 = vsel %vm140, %v376, %v377
    %v379 = vsel %vm324, %v373, %v378
    %v380 = vsel %vm324, %v375, %v377
    %v383 = vadd.f32 %v292, %v379
    %v384 = vadd.f32 %v293, %v380
    %v385 = vstv %s99
    %v386 = vmul.f32 %v127, %v385
    %v387 = vmul.f32 %v128, %v385
    %390 = vrot.lane.b32.xlu0 %v386, 100
    %v391 = vpop.permute.xlu0 %390
    %392 = vrot.lane.b32.xlu0 %v387, 100
    %v393 = vpop.permute.xlu0 %392
    %v394 = vrot.slane %v391, 2
    %v395 = vrot.slane %v393, 2
    %v396 = vsel %vm140, %v394, %v395
    %v397 = vsel %vm324, %v391, %v396
    %v398 = vsel %vm324, %v393, %v395
    %v401 = vadd.f32 %v310, %v397
    %v402 = vadd.f32 %v311, %v398
    %v403 = vstv %s64
    %v404 = vmul.f32 %v127, %v403
    %v405 = vmul.f32 %v128, %v403
    %408 = vrot.lane.b32.xlu0 %v404, 99
    %v409 = vpop.permute.xlu0 %408
    %410 = vrot.lane.b32.xlu0 %v405, 99
    %v411 = vpop.permute.xlu0 %410
    %v412 = vrot.slane %v409, 2
    %v413 = vrot.slane %v411, 2
    %v414 = vsel %vm140, %v412, %v413
    %vm415 = vcmask 809984
    %v416 = vsel %vm415, %v409, %v414
    %v417 = vsel %vm415, %v411, %v413
    %v420 = vadd.f32 %v329, %v416
    %v421 = vadd.f32 %v330, %v417
    %v422 = vstv %s73
    %v423 = vmul.f32 %v127, %v422
    %v424 = vmul.f32 %v128, %v422
    %427 = vrot.lane.b32.xlu0 %v423, 99
    %v428 = vpop.permute.xlu0 %427
    %429 = vrot.lane.b32.xlu0 %v424, 99
    %v430 = vpop.permute.xlu0 %429
    %v431 = vrot.slane %v428, 2
    %v432 = vrot.slane %v430, 2
    %v433 = vsel %vm140, %v431, %v432
    %v434 = vsel %vm415, %v428, %v433
    %v435 = vsel %vm415, %v430, %v432
    %v438 = vadd.f32 %v347, %v434
    %v439 = vadd.f32 %v348, %v435
    %v440 = vstv %s82
    %v441 = vmul.f32 %v127, %v440
    %v442 = vmul.f32 %v128, %v440
    %445 = vrot.lane.b32.xlu0 %v441, 99
    %v446 = vpop.permute.xlu0 %445
    %447 = vrot.lane.b32.xlu0 %v442, 99
    %v448 = vpop.permute.xlu0 %447
    %v449 = vrot.slane %v446, 2
    %v450 = vrot.slane %v448, 2
    %v451 = vsel %vm140, %v449, %v450
    %v452 = vsel %vm415, %v446, %v451
    %v453 = vsel %vm415, %v448, %v450
    %v456 = vadd.f32 %v365, %v452
    %v457 = vadd.f32 %v366, %v453
    %v458 = vstv %s91
    %v459 = vmul.f32 %v127, %v458
    %v460 = vmul.f32 %v128, %v458
    %463 = vrot.lane.b32.xlu0 %v459, 99
    %v464 = vpop.permute.xlu0 %463
    %465 = vrot.lane.b32.xlu0 %v460, 99
    %v466 = vpop.permute.xlu0 %465
    %v467 = vrot.slane %v464, 2
    %v468 = vrot.slane %v466, 2
    %v469 = vsel %vm140, %v467, %v468
    %v470 = vsel %vm415, %v464, %v469
    %v471 = vsel %vm415, %v466, %v468
    %v474 = vadd.f32 %v383, %v470
    %v475 = vadd.f32 %v384, %v471
    %v476 = vstv %s100
    %v477 = vmul.f32 %v127, %v476
    %v478 = vmul.f32 %v128, %v476
    %481 = vrot.lane.b32.xlu0 %v477, 99
    %v482 = vpop.permute.xlu0 %481
    %483 = vrot.lane.b32.xlu0 %v478, 99
    %v484 = vpop.permute.xlu0 %483
    %v485 = vrot.slane %v482, 2
    %v486 = vrot.slane %v484, 2
    %v487 = vsel %vm140, %v485, %v486
    %v488 = vsel %vm415, %v482, %v487
    %v489 = vsel %vm415, %v484, %v486
    %v492 = vadd.f32 %v401, %v488
    %v493 = vadd.f32 %v402, %v489
    %v494 = vstv %s65
    %v495 = vmul.f32 %v127, %v494
    %v496 = vmul.f32 %v128, %v494
    %499 = vrot.lane.b32.xlu0 %v495, 98
    %v500 = vpop.permute.xlu0 %499
    %501 = vrot.lane.b32.xlu0 %v496, 98
    %v502 = vpop.permute.xlu0 %501
    %v503 = vrot.slane %v500, 2
    %v504 = vrot.slane %v502, 2
    %v505 = vsel %vm140, %v503, %v504
    %vm506 = vcmask 801792
    %v507 = vsel %vm506, %v500, %v505
    %v508 = vsel %vm506, %v502, %v504
    %v511 = vadd.f32 %v420, %v507
    %v512 = vadd.f32 %v421, %v508
    %v513 = vstv %s74
    %v514 = vmul.f32 %v127, %v513
    %v515 = vmul.f32 %v128, %v513
    %518 = vrot.lane.b32.xlu0 %v514, 98
    %v519 = vpop.permute.xlu0 %518
    %520 = vrot.lane.b32.xlu0 %v515, 98
    %v521 = vpop.permute.xlu0 %520
    %v522 = vrot.slane %v519, 2
    %v523 = vrot.slane %v521, 2
    %v524 = vsel %vm140, %v522, %v523
    %v525 = vsel %vm506, %v519, %v524
    %v526 = vsel %vm506, %v521, %v523
    %v529 = vadd.f32 %v438, %v525
    %v530 = vadd.f32 %v439, %v526
    %v531 = vstv %s83
    %v532 = vmul.f32 %v127, %v531
    %v533 = vmul.f32 %v128, %v531
    %536 = vrot.lane.b32.xlu0 %v532, 98
    %v537 = vpop.permute.xlu0 %536
    %538 = vrot.lane.b32.xlu0 %v533, 98
    %v539 = vpop.permute.xlu0 %538
    %v540 = vrot.slane %v537, 2
    %v541 = vrot.slane %v539, 2
    %v542 = vsel %vm140, %v540, %v541
    %v543 = vsel %vm506, %v537, %v542
    %v544 = vsel %vm506, %v539, %v541
    %v547 = vadd.f32 %v456, %v543
    %v548 = vadd.f32 %v457, %v544
    %v549 = vstv %s92
    %v550 = vmul.f32 %v127, %v549
    %v551 = vmul.f32 %v128, %v549
    %554 = vrot.lane.b32.xlu0 %v550, 98
    %v555 = vpop.permute.xlu0 %554
    %556 = vrot.lane.b32.xlu0 %v551, 98
    %v557 = vpop.permute.xlu0 %556
    %v558 = vrot.slane %v555, 2
    %v559 = vrot.slane %v557, 2
    %v560 = vsel %vm140, %v558, %v559
    %v561 = vsel %vm506, %v555, %v560
    %v562 = vsel %vm506, %v557, %v559
    %v565 = vadd.f32 %v474, %v561
    %v566 = vadd.f32 %v475, %v562
    %v567 = vstv %s101
    %v568 = vmul.f32 %v127, %v567
    %v569 = vmul.f32 %v128, %v567
    %572 = vrot.lane.b32.xlu0 %v568, 98
    %v573 = vpop.permute.xlu0 %572
    %574 = vrot.lane.b32.xlu0 %v569, 98
    %v575 = vpop.permute.xlu0 %574
    %v576 = vrot.slane %v573, 2
    %v577 = vrot.slane %v575, 2
    %v578 = vsel %vm140, %v576, %v577
    %v579 = vsel %vm506, %v573, %v578
    %v580 = vsel %vm506, %v575, %v577
    %v583 = vadd.f32 %v492, %v579
    %v584 = vadd.f32 %v493, %v580
    %v585 = vstv %s66
    %v586 = vmul.f32 %v127, %v585
    %v587 = vmul.f32 %v128, %v585
    %590 = vrot.lane.b32.xlu0 %v586, 72
    %v591 = vpop.permute.xlu0 %590
    %592 = vrot.lane.b32.xlu0 %v587, 72
    %v593 = vpop.permute.xlu0 %592
    %v594 = vrot.slane %v591, 2
    %v595 = vrot.slane %v593, 2
    %v596 = vsel %vm140, %v594, %v595
    %vm597 = vcmask 588800
    %v598 = vsel %vm597, %v591, %v596
    %v599 = vsel %vm597, %v593, %v595
    %v602 = vadd.f32 %v511, %v598
    %v603 = vadd.f32 %v512, %v599
    %v604 = vstv %s75
    %v605 = vmul.f32 %v127, %v604
    %v606 = vmul.f32 %v128, %v604
    %609 = vrot.lane.b32.xlu0 %v605, 72
    %v610 = vpop.permute.xlu0 %609
    %611 = vrot.lane.b32.xlu0 %v606, 72
    %v612 = vpop.permute.xlu0 %611
    %v613 = vrot.slane %v610, 2
    %v614 = vrot.slane %v612, 2
    %v615 = vsel %vm140, %v613, %v614
    %v616 = vsel %vm597, %v610, %v615
    %v617 = vsel %vm597, %v612, %v614
    %v620 = vadd.f32 %v529, %v616
    %v621 = vadd.f32 %v530, %v617
    %v622 = vstv %s84
    %v623 = vmul.f32 %v127, %v622
    %v624 = vmul.f32 %v128, %v622
    %627 = vrot.lane.b32.xlu0 %v623, 72
    %v628 = vpop.permute.xlu0 %627
    %629 = vrot.lane.b32.xlu0 %v624, 72
    %v630 = vpop.permute.xlu0 %629
    %v631 = vrot.slane %v628, 2
    %v632 = vrot.slane %v630, 2
    %v633 = vsel %vm140, %v631, %v632
    %v634 = vsel %vm597, %v628, %v633
    %v635 = vsel %vm597, %v630, %v632
    %v638 = vadd.f32 %v547, %v634
    %v639 = vadd.f32 %v548, %v635
    %v640 = vstv %s93
    %v641 = vmul.f32 %v127, %v640
    %v642 = vmul.f32 %v128, %v640
    %645 = vrot.lane.b32.xlu0 %v641, 72
    %v646 = vpop.permute.xlu0 %645
    %647 = vrot.lane.b32.xlu0 %v642, 72
    %v648 = vpop.permute.xlu0 %647
    %v649 = vrot.slane %v646, 2
    %v650 = vrot.slane %v648, 2
    %v651 = vsel %vm140, %v649, %v650
    %v652 = vsel %vm597, %v646, %v651
    %v653 = vsel %vm597, %v648, %v650
    %v656 = vadd.f32 %v565, %v652
    %v657 = vadd.f32 %v566, %v653
    %v658 = vstv %s102
    %v659 = vmul.f32 %v127, %v658
    %v660 = vmul.f32 %v128, %v658
    %663 = vrot.lane.b32.xlu0 %v659, 72
    %v664 = vpop.permute.xlu0 %663
    %665 = vrot.lane.b32.xlu0 %v660, 72
    %v666 = vpop.permute.xlu0 %665
    %v667 = vrot.slane %v664, 2
    %v668 = vrot.slane %v666, 2
    %v669 = vsel %vm140, %v667, %v668
    %v670 = vsel %vm597, %v664, %v669
    %v671 = vsel %vm597, %v666, %v668
    %v674 = vadd.f32 %v583, %v670
    %v675 = vadd.f32 %v584, %v671
    %v676 = vstv %s67
    %v677 = vmul.f32 %v127, %v676
    %v678 = vmul.f32 %v128, %v676
    %681 = vrot.lane.b32.xlu0 %v677, 71
    %v682 = vpop.permute.xlu0 %681
    %683 = vrot.lane.b32.xlu0 %v678, 71
    %v684 = vpop.permute.xlu0 %683
    %v685 = vrot.slane %v682, 2
    %v686 = vrot.slane %v684, 2
    %v687 = vsel %vm140, %v685, %v686
    %vm688 = vcmask 580608
    %v689 = vsel %vm688, %v682, %v687
    %v690 = vsel %vm688, %v684, %v686
    %v693 = vadd.f32 %v602, %v689
    %v694 = vadd.f32 %v603, %v690
    %v695 = vstv %s76
    %v696 = vmul.f32 %v127, %v695
    %v697 = vmul.f32 %v128, %v695
    %700 = vrot.lane.b32.xlu0 %v696, 71
    %v701 = vpop.permute.xlu0 %700
    %702 = vrot.lane.b32.xlu0 %v697, 71
    %v703 = vpop.permute.xlu0 %702
    %v704 = vrot.slane %v701, 2
    %v705 = vrot.slane %v703, 2
    %v706 = vsel %vm140, %v704, %v705
    %v707 = vsel %vm688, %v701, %v706
    %v708 = vsel %vm688, %v703, %v705
    %v711 = vadd.f32 %v620, %v707
    %v712 = vadd.f32 %v621, %v708
    %v713 = vstv %s85
    %v714 = vmul.f32 %v127, %v713
    %v715 = vmul.f32 %v128, %v713
    %718 = vrot.lane.b32.xlu0 %v714, 71
    %v719 = vpop.permute.xlu0 %718
    %720 = vrot.lane.b32.xlu0 %v715, 71
    %v721 = vpop.permute.xlu0 %720
    %v722 = vrot.slane %v719, 2
    %v723 = vrot.slane %v721, 2
    %v724 = vsel %vm140, %v722, %v723
    %v725 = vsel %vm688, %v719, %v724
    %v726 = vsel %vm688, %v721, %v723
    %v729 = vadd.f32 %v638, %v725
    %v730 = vadd.f32 %v639, %v726
    %v731 = vstv %s94
    %v732 = vmul.f32 %v127, %v731
    %v733 = vmul.f32 %v128, %v731
    %736 = vrot.lane.b32.xlu0 %v732, 71
    %v737 = vpop.permute.xlu0 %736
    %738 = vrot.lane.b32.xlu0 %v733, 71
    %v739 = vpop.permute.xlu0 %738
    %v740 = vrot.slane %v737, 2
    %v741 = vrot.slane %v739, 2
    %v742 = vsel %vm140, %v740, %v741
    %v743 = vsel %vm688, %v737, %v742
    %v744 = vsel %vm688, %v739, %v741
    %v747 = vadd.f32 %v656, %v743
    %v748 = vadd.f32 %v657, %v744
    %v749 = vstv %s103
    %v750 = vmul.f32 %v127, %v749
    %v751 = vmul.f32 %v128, %v749
    %754 = vrot.lane.b32.xlu0 %v750, 71
    %v755 = vpop.permute.xlu0 %754
    %756 = vrot.lane.b32.xlu0 %v751, 71
    %v757 = vpop.permute.xlu0 %756
    %v758 = vrot.slane %v755, 2
    %v759 = vrot.slane %v757, 2
    %v760 = vsel %vm140, %v758, %v759
    %v761 = vsel %vm688, %v755, %v760
    %v762 = vsel %vm688, %v757, %v759
    %v765 = vadd.f32 %v674, %v761
    %v766 = vadd.f32 %v675, %v762
    %v767 = vstv %s68
    %v768 = vmul.f32 %v127, %v767
    %v769 = vmul.f32 %v128, %v767
    %772 = vrot.lane.b32.xlu0 %v768, 70
    %v773 = vpop.permute.xlu0 %772
    %774 = vrot.lane.b32.xlu0 %v769, 70
    %v775 = vpop.permute.xlu0 %774
    %v776 = vrot.slane %v773, 2
    %v777 = vrot.slane %v775, 2
    %v778 = vsel %vm140, %v776, %v777
    %vm779 = vcmask 572416
    %v780 = vsel %vm779, %v773, %v778
    %v781 = vsel %vm779, %v775, %v777
    %v784 = vadd.f32 %v693, %v780
    %v785 = vadd.f32 %v694, %v781
    %v786 = vstv %s77
    %v787 = vmul.f32 %v127, %v786
    %v788 = vmul.f32 %v128, %v786
    %791 = vrot.lane.b32.xlu0 %v787, 70
    %v792 = vpop.permute.xlu0 %791
    %793 = vrot.lane.b32.xlu0 %v788, 70
    %v794 = vpop.permute.xlu0 %793
    %v795 = vrot.slane %v792, 2
    %v796 = vrot.slane %v794, 2
    %v797 = vsel %vm140, %v795, %v796
    %v798 = vsel %vm779, %v792, %v797
    %v799 = vsel %vm779, %v794, %v796
    %v802 = vadd.f32 %v711, %v798
    %v803 = vadd.f32 %v712, %v799
    %v804 = vstv %s86
    %v805 = vmul.f32 %v127, %v804
    %v806 = vmul.f32 %v128, %v804
    %809 = vrot.lane.b32.xlu0 %v805, 70
    %v810 = vpop.permute.xlu0 %809
    %811 = vrot.lane.b32.xlu0 %v806, 70
    %v812 = vpop.permute.xlu0 %811
    %v813 = vrot.slane %v810, 2
    %v814 = vrot.slane %v812, 2
    %v815 = vsel %vm140, %v813, %v814
    %v816 = vsel %vm779, %v810, %v815
    %v817 = vsel %vm779, %v812, %v814
    %v820 = vadd.f32 %v729, %v816
    %v821 = vadd.f32 %v730, %v817
    %v822 = vstv %s95
    %v823 = vmul.f32 %v127, %v822
    %v824 = vmul.f32 %v128, %v822
    %827 = vrot.lane.b32.xlu0 %v823, 70
    %v828 = vpop.permute.xlu0 %827
    %829 = vrot.lane.b32.xlu0 %v824, 70
    %v830 = vpop.permute.xlu0 %829
    %v831 = vrot.slane %v828, 2
    %v832 = vrot.slane %v830, 2
    %v833 = vsel %vm140, %v831, %v832
    %v834 = vsel %vm779, %v828, %v833
    %v835 = vsel %vm779, %v830, %v832
    %v838 = vadd.f32 %v747, %v834
    %v839 = vadd.f32 %v748, %v835
    %v840 = vstv %s104
    %v841 = vmul.f32 %v127, %v840
    %v842 = vmul.f32 %v128, %v840
    %845 = vrot.lane.b32.xlu0 %v841, 70
    %v846 = vpop.permute.xlu0 %845
    %847 = vrot.lane.b32.xlu0 %v842, 70
    %v848 = vpop.permute.xlu0 %847
    %v849 = vrot.slane %v846, 2
    %v850 = vrot.slane %v848, 2
    %v851 = vsel %vm140, %v849, %v850
    %v852 = vsel %vm779, %v846, %v851
    %v853 = vsel %vm779, %v848, %v850
    %v856 = vadd.f32 %v765, %v852
    %v857 = vadd.f32 %v766, %v853
    %v858 = vstv %s105
    %v859 = vadd.f32 %v784, %v858
    %v860 = vadd.f32 %v785, %v858
    %v861 = vmax.f32 %v859, 0.0
    %v862 = vmax.f32 %v860, 0.0
    %863 = vst [vmem:[#allocation2] sm:$0xff] %v861
    %864 = vst [vmem:[#allocation2 + $0x8] sm:$0xf] %v862
    %v865 = vstv %s106
    %v866 = vadd.f32 %v802, %v865
    %v867 = vadd.f32 %v803, %v865
    %v868 = vmax.f32 %v866, 0.0
    %v869 = vmax.f32 %v867, 0.0
    %870 = vst [vmem:[#allocation2 + $0xc] sm:$0xff] %v868
    %871 = vst [vmem:[#allocation2 + $0x14] sm:$0xf] %v869
    %v872 = vstv %s107
    %v873 = vadd.f32 %v820, %v872
    %v874 = vadd.f32 %v821, %v872
    %v875 = vmax.f32 %v873, 0.0
    %v876 = vmax.f32 %v874, 0.0
    %877 = vst [vmem:[#allocation2 + $0x18] sm:$0xff] %v875
    %878 = vst [vmem:[#allocation2 + $0x20] sm:$0xf] %v876
    %v879 = vstv %s108
    %v880 = vadd.f32 %v838, %v879
    %v881 = vadd.f32 %v839, %v879
    %v882 = vmax.f32 %v880, 0.0
    %v883 = vmax.f32 %v881, 0.0
    %884 = vst [vmem:[#allocation2 + $0x24] sm:$0xff] %v882
    %885 = vst [vmem:[#allocation2 + $0x2c] sm:$0xf] %v883
    %v886 = vstv %s109
    %v887 = vadd.f32 %v856, %v886
    %v888 = vadd.f32 %v857, %v886
    %v889 = vmax.f32 %v887, 0.0
    %v890 = vmax.f32 %v888, 0.0
    %891 = vst [vmem:[#allocation2 + $0x30] sm:$0xff] %v889
    %892 = vst [vmem:[#allocation2 + $0x38] sm:$0xf] %v890
    %v893 = vld [vmem:[#allocation2] sm:$0xff]
    %v894 = vld [vmem:[#allocation2 + $0x8] sm:$0xff]
    %v895 = vld [vmem:[#allocation2 + $0x10] sm:$0xff]
    %v896 = vld [vmem:[#allocation2 + $0x18] sm:$0xff]
    %v897 = vld [vmem:[#allocation2 + $0x20] sm:$0xff]
    %v898 = vld [vmem:[#allocation2 + $0x28] sm:$0xff]
    %v899 = vld [vmem:[#allocation2 + $0x30] sm:$0xff]
    %v900 = vld [vmem:[#allocation2 + $0x38] sm:$0xf]
    %v901 = vld [vmem:[#allocation9] sm:$0xff]
    %v902 = vld [vmem:[#allocation9 + $0x8] sm:$0xff]
    %v903 = vld [vmem:[#allocation9 + $0x10] sm:$0xff]
    %v904 = vld [vmem:[#allocation9 + $0x18] sm:$0xff]
    %v905 = vld [vmem:[#allocation9 + $0x20] sm:$0xff]
    %v906 = vld [vmem:[#allocation9 + $0x28] sm:$0xff]
    %v907 = vld [vmem:[#allocation9 + $0x30] sm:$0xff]
    %v908 = vld [vmem:[#allocation9 + $0x38] sm:$0xff]
    %v909 = vld [vmem:[#allocation9 + $0x40] sm:$0xff]
    %v910 = vld [vmem:[#allocation9 + $0x48] sm:$0xff]
    %v911 = vld [vmem:[#allocation9 + $0x50] sm:$0xff]
    %v912 = vld [vmem:[#allocation9 + $0x58] sm:$0xff]
    %v913 = vld [vmem:[#allocation9 + $0x60] sm:$0xff]
    %v914 = vld [vmem:[#allocation9 + $0x68] sm:$0xff]
    %v915 = vld [vmem:[#allocation9 + $0x70] sm:$0xff]
    %v916 = vld [vmem:[#allocation9 + $0x78] sm:$0xff]
    %v917 = vld [vmem:[#allocation9 + $0x80] sm:$0xff]
    %v918 = vld [vmem:[#allocation9 + $0x88] sm:$0xff]
    %v919 = vld [vmem:[#allocation9 + $0x90] sm:$0xff]
    %v920 = vld [vmem:[#allocation9 + $0x98] sm:$0xff]
    %v921 = vld [vmem:[#allocation9 + $0xa0] sm:$0xff]
    %v922 = vld [vmem:[#allocation9 + $0xa8] sm:$0xff]
    %v923 = vld [vmem:[#allocation9 + $0xb0] sm:$0xff]
    %v924 = vld [vmem:[#allocation9 + $0xb8] sm:$0xff]
    %v925 = vld [vmem:[#allocation9 + $0xc0] sm:$0xff]
    %v926 = vld [vmem:[#allocation9 + $0xc8] sm:$0xff]
    %v927 = vld [vmem:[#allocation9 + $0xd0] sm:$0xff]
    %v928 = vld [vmem:[#allocation9 + $0xd8] sm:$0xff]
    %v929 = vld [vmem:[#allocation9 + $0xe0] sm:$0xff]
    %v930 = vld [vmem:[#allocation9 + $0xe8] sm:$0xff]
    %v931 = vld [vmem:[#allocation9 + $0xf0] sm:$0x3]
    %v932 = vld [vmem:[#allocation9 + $0xf8] sm:$0x3]
    %v933 = vld [vmem:[#allocation9 + $0x100] sm:$0x3]
    %v934 = vld [vmem:[#allocation9 + $0x108] sm:$0x3]
    %v935 = vld [vmem:[#allocation9 + $0x110] sm:$0x3]
    %v936 = vld [vmem:[#allocation9 + $0x118] sm:$0x3]
    %v937 = vld [vmem:[#allocation9 + $0x120] sm:$0x3]
    %v938 = vld [vmem:[#allocation9 + $0x128] sm:$0x3]
    %v939 = vld [vmem:[#allocation9 + $0x130] sm:$0x3]
    %v940 = vld [vmem:[#allocation9 + $0x138] sm:$0x3]
    %v941 = vld [vmem:[#allocation9 + $0x140] sm:$0x3]
    %v942 = vld [vmem:[#allocation9 + $0x148] sm:$0x3]
    %v943 = vld [vmem:[#allocation9 + $0x150] sm:$0x3]
    %v944 = vld [vmem:[#allocation9 + $0x158] sm:$0x3]
    %v945 = vld [vmem:[#allocation9 + $0x160] sm:$0x3]
    %v946 = vld [vmem:[#allocation9 + $0x168] sm:$0x3]
    %v947 = vld [vmem:[#allocation9 + $0x170] sm:$0x3]
    %v948 = vld [vmem:[#allocation9 + $0x178] sm:$0x3]
    %v949 = vld [vmem:[#allocation9 + $0x180] sm:$0x3]
    %v950 = vld [vmem:[#allocation9 + $0x188] sm:$0x3]
    %v951 = vld [vmem:[#allocation9 + $0x190] sm:$0x3]
    %v952 = vld [vmem:[#allocation9 + $0x198] sm:$0x3]
    %v953 = vld [vmem:[#allocation9 + $0x1a0] sm:$0x3]
    %v954 = vld [vmem:[#allocation9 + $0x1a8] sm:$0x3]
    %v955 = vld [vmem:[#allocation9 + $0x1b0] sm:$0x3]
    %v956 = vld [vmem:[#allocation9 + $0x1b8] sm:$0x3]
    %v957 = vld [vmem:[#allocation9 + $0x1c0] sm:$0x3]
    %v958 = vld [vmem:[#allocation9 + $0x1c8] sm:$0x3]
    %v959 = vld [vmem:[#allocation9 + $0x1d0] sm:$0x3]
    %v960 = vld [vmem:[#allocation9 + $0x1d8] sm:$0x3]
    %v961 = vld [vmem:[%s4] sm:$0x1]
    %v963 = vlaneseq
    %v964 = vshrl.u32 %v963, 7
    %v965 = vsub.s32 0, %v964
    %v966 = vrot.slane %v961, %v965
    %v976 = vcombine.high %v893, %v893
    %v978 = vunpack.c.l.s4 1983009808
    %v979 = vunpack.c.0.s8 %v978
    %v980 = vlaneseq
    %v981 = vshrl.u32 %v980, 7
    %v982 = vsub.s32 %v979, %v981
    %v983 = vrot.slane %v893, %v982
    %v985 = vunpack.c.l.s4 1983009808
    %v986 = vunpack.c.0.s8 %v985
    %v987 = vlaneseq
    %v988 = vshrl.u32 %v987, 7
    %v989 = vsub.s32 %v986, %v988
    %v990 = vrot.slane %v976, %v989
    %v991 = vcombine.high %v983, %v983
    %v992 = vcombine.high %v990, %v990
    %v993 = vcombine.high %v894, %v894
    %v995 = vunpack.c.l.s4 1983009808
    %v996 = vunpack.c.0.s8 %v995
    %v997 = vlaneseq
    %v998 = vshrl.u32 %v997, 7
    %v999 = vsub.s32 %v996, %v998
    %v1000 = vrot.slane %v894, %v999
    %v1002 = vunpack.c.l.s4 1983009808
    %v1003 = vunpack.c.0.s8 %v1002
    %v1004 = vlaneseq
    %v1005 = vshrl.u32 %v1004, 7
    %v1006 = vsub.s32 %v1003, %v1005
    %v1007 = vrot.slane %v993, %v1006
    %v1008 = vcombine.high %v1000, %v1000
    %v1009 = vcombine.high %v1007, %v1007
    %v1010 = vcombine.high %v895, %v895
    %v1012 = vunpack.c.l.s4 1983009808
    %v1013 = vunpack.c.0.s8 %v1012
    %v1014 = vlaneseq
    %v1015 = vshrl.u32 %v1014, 7
    %v1016 = vsub.s32 %v1013, %v1015
    %v1017 = vrot.slane %v895, %v1016
    %v1019 = vunpack.c.l.s4 1983009808
    %v1020 = vunpack.c.0.s8 %v1019
    %v1021 = vlaneseq
    %v1022 = vshrl.u32 %v1021, 7
    %v1023 = vsub.s32 %v1020, %v1022
    %v1024 = vrot.slane %v1010, %v1023
    %v1025 = vcombine.high %v1017, %v1017
    %v1026 = vcombine.high %v1024, %v1024
    %v1027 = vcombine.high %v896, %v896
    %v1029 = vunpack.c.l.s4 1983009808
    %v1030 = vunpack.c.0.s8 %v1029
    %v1031 = vlaneseq
    %v1032 = vshrl.u32 %v1031, 7
    %v1033 = vsub.s32 %v1030, %v1032
    %v1034 = vrot.slane %v896, %v1033
    %v1036 = vunpack.c.l.s4 1983009808
    %v1037 = vunpack.c.0.s8 %v1036
    %v1038 = vlaneseq
    %v1039 = vshrl.u32 %v1038, 7
    %v1040 = vsub.s32 %v1037, %v1039
    %v1041 = vrot.slane %v1027, %v1040
    %v1042 = vcombine.high %v1034, %v1034
    %v1043 = vcombine.high %v1041, %v1041
    %v1044 = vcombine.high %v897, %v897
    %v1046 = vunpack.c.l.s4 1983009808
    %v1047 = vunpack.c.0.s8 %v1046
    %v1048 = vlaneseq
    %v1049 = vshrl.u32 %v1048, 7
    %v1050 = vsub.s32 %v1047, %v1049
    %v1051 = vrot.slane %v897, %v1050
    %v1053 = vunpack.c.l.s4 1983009808
    %v1054 = vunpack.c.0.s8 %v1053
    %v1055 = vlaneseq
    %v1056 = vshrl.u32 %v1055, 7
    %v1057 = vsub.s32 %v1054, %v1056
    %v1058 = vrot.slane %v1044, %v1057
    %v1059 = vcombine.high %v1051, %v1051
    %v1060 = vcombine.high %v1058, %v1058
    %v1061 = vcombine.high %v898, %v898
    %v1063 = vunpack.c.l.s4 1983009808
    %v1064 = vunpack.c.0.s8 %v1063
    %v1065 = vlaneseq
    %v1066 = vshrl.u32 %v1065, 7
    %v1067 = vsub.s32 %v1064, %v1066
    %v1068 = vrot.slane %v898, %v1067
    %v1070 = vunpack.c.l.s4 1983009808
    %v1071 = vunpack.c.0.s8 %v1070
    %v1072 = vlaneseq
    %v1073 = vshrl.u32 %v1072, 7
    %v1074 = vsub.s32 %v1071, %v1073
    %v1075 = vrot.slane %v1061, %v1074
    %v1076 = vcombine.high %v1068, %v1068
    %v1077 = vcombine.high %v1075, %v1075
    %v1078 = vcombine.high %v899, %v899
    %v1080 = vunpack.c.l.s4 1983009808
    %v1081 = vunpack.c.0.s8 %v1080
    %v1082 = vlaneseq
    %v1083 = vshrl.u32 %v1082, 7
    %v1084 = vsub.s32 %v1081, %v1083
    %v1085 = vrot.slane %v899, %v1084
    %v1087 = vunpack.c.l.s4 1983009808
    %v1088 = vunpack.c.0.s8 %v1087
    %v1089 = vlaneseq
    %v1090 = vshrl.u32 %v1089, 7
    %v1091 = vsub.s32 %v1088, %v1090
    %v1092 = vrot.slane %v1078, %v1091
    %v1093 = vcombine.high %v1085, %v1085
    %v1094 = vcombine.high %v1092, %v1092
    %v1096 = vunpack.c.l.s4 1983009808
    %v1097 = vunpack.c.0.s8 %v1096
    %v1098 = vlaneseq
    %v1099 = vshrl.u32 %v1098, 7
    %v1100 = vsub.s32 %v1097, %v1099
    %v1101 = vrot.slane %v900, %v1100
    %v1102 = vcombine.high %v1101, %v1101
    %1133 = vmatprep.subr.mxu0 %v902
    %1134 = vmatpush1.xpose.msra.mxu0 %v901
    %1135 = vmatprep.subr.mxu0 %v932
    %1136 = vmatpush1.xpose.msra.mxu0 %v931
    %1137 = vmatprep.subr.mxu0 0.0
    %1138 = vmatpush1.xpose.msra.mxu0 0.0
    %1139 = vmatprep.subr.mxu0 0.0
    %1140 = vmatpush1.xpose.msra.mxu0 0.0
    %1141 = vmatprep.subr.mxu0 0.0
    %1142 = vmatpush1.xpose.msra.mxu0 0.0
    %1143 = vmatprep.subr.mxu0 0.0
    %1144 = vmatpush1.xpose.msra.mxu0 0.0
    %1145 = vmatprep.subr.mxu0 0.0
    %1146 = vmatpush1.xpose.msra.mxu0 0.0
    %1147 = vmatprep.subr.mxu0 0.0
    %1148 = vmatpush1.xpose.msra.mxu0 0.0
    %1149 = vmatprep.subr.mxu0 0.0
    %1150 = vmatpush1.xpose.msra.mxu0 0.0
    %1151 = vmatprep.subr.mxu0 0.0
    %1152 = vmatpush1.xpose.msra.mxu0 0.0
    %1153 = vmatprep.subr.mxu0 0.0
    %1154 = vmatpush1.xpose.msra.mxu0 0.0
    %1155 = vmatprep.subr.mxu0 0.0
    %1156 = vmatpush1.xpose.msra.mxu0 0.0
    %1157 = vmatprep.subr.mxu0 0.0
    %1158 = vmatpush1.xpose.msra.mxu0 0.0
    %1159 = vmatprep.subr.mxu0 0.0
    %1160 = vmatpush1.xpose.msra.mxu0 0.0
    %1161 = vmatprep.subr.mxu0 0.0
    %1162 = vmatpush1.xpose.msra.mxu0 0.0
    %1163 = vmatprep.subr.mxu0 0.0
    %1164 = vmatpush1.xpose.msra.mxu0 0.0
    %1165 = vmatprep.subr.mxu0 0.0
    %1166 = vmatpush1.xpose.msra.mxu0 0.0
    %1167 = vmatprep.subr.mxu0 0.0
    %1168 = vmatpush1.xpose.msra.mxu0 0.0
    %1169 = vmatprep.subr.mxu0 0.0
    %1170 = vmatpush1.xpose.msra.mxu0 0.0
    %1171 = vmatprep.subr.mxu0 0.0
    %1172 = vmatpush1.xpose.msra.mxu0 0.0
    %1173 = vmatprep.subr.mxu0 0.0
    %1174 = vmatpush1.xpose.msra.mxu0 0.0
    %1175 = vmatprep.subr.mxu0 0.0
    %1176 = vmatpush1.xpose.msra.mxu0 0.0
    %1177 = vmatprep.subr.mxu0 0.0
    %1178 = vmatpush1.xpose.msra.mxu0 0.0
    %1179 = vmatprep.subr.mxu0 0.0
    %1180 = vmatpush1.xpose.msra.mxu0 0.0
    %1181 = vmatprep.subr.mxu0 0.0
    %1182 = vmatpush1.xpose.msra.mxu0 0.0
    %1183 = vmatprep.subr.mxu0 0.0
    %1184 = vmatpush1.xpose.msra.mxu0 0.0
    %1185 = vmatprep.subr.mxu0 0.0
    %1186 = vmatpush1.xpose.msra.mxu0 0.0
    %1187 = vmatprep.subr.mxu0 0.0
    %1188 = vmatpush1.xpose.msra.mxu0 0.0
    %1189 = vmatprep.subr.mxu0 0.0
    %1190 = vmatpush1.xpose.msra.mxu0 0.0
    %1191 = vmatprep.subr.mxu0 0.0
    %1192 = vmatpush1.xpose.msra.mxu0 0.0
    %1193 = vmatprep.subr.mxu0 0.0
    %1194 = vmatpush1.xpose.msra.mxu0 0.0
    %1195 = vmatprep.subr.mxu0 0.0
    %1196 = vmatpush1.xpose.msra.mxu0 0.0
    %1197 = vmatprep.mubr.f32.mxu0 %v991
    %1198 = vmatmul.mubr.f32.gmra.mrb[0].mxu0 %v983
    %v1199 = vpop.f32.mrb[0].mxu0
    %v1200 = vadd.f32 %v966, %v1199
    %v1201 = vpop.f32.mrb[0].mxu0
    %1202 = vdwg.mxu0
    %1203 = vmatprep.subr.mxu0 %v904
    %1204 = vmatpush1.xpose.msra.mxu0 %v903
    %1205 = vmatprep.subr.mxu0 %v934
    %1206 = vmatpush1.xpose.msra.mxu0 %v933
    %1207 = vmatprep.subr.mxu0 0.0
    %1208 = vmatpush1.xpose.msra.mxu0 0.0
    %1209 = vmatprep.subr.mxu0 0.0
    %1210 = vmatpush1.xpose.msra.mxu0 0.0
    %1211 = vmatprep.subr.mxu0 0.0
    %1212 = vmatpush1.xpose.msra.mxu0 0.0
    %1213 = vmatprep.subr.mxu0 0.0
    %1214 = vmatpush1.xpose.msra.mxu0 0.0
    %1215 = vmatprep.subr.mxu0 0.0
    %1216 = vmatpush1.xpose.msra.mxu0 0.0
    %1217 = vmatprep.subr.mxu0 0.0
    %1218 = vmatpush1.xpose.msra.mxu0 0.0
    %1219 = vmatprep.subr.mxu0 0.0
    %1220 = vmatpush1.xpose.msra.mxu0 0.0
    %1221 = vmatprep.subr.mxu0 0.0
    %1222 = vmatpush1.xpose.msra.mxu0 0.0
    %1223 = vmatprep.subr.mxu0 0.0
    %1224 = vmatpush1.xpose.msra.mxu0 0.0
    %1225 = vmatprep.subr.mxu0 0.0
    %1226 = vmatpush1.xpose.msra.mxu0 0.0
    %1227 = vmatprep.subr.mxu0 0.0
    %1228 = vmatpush1.xpose.msra.mxu0 0.0
    %1229 = vmatprep.subr.mxu0 0.0
    %1230 = vmatpush1.xpose.msra.mxu0 0.0
    %1231 = vmatprep.subr.mxu0 0.0
    %1232 = vmatpush1.xpose.msra.mxu0 0.0
    %1233 = vmatprep.subr.mxu0 0.0
    %1234 = vmatpush1.xpose.msra.mxu0 0.0
    %1235 = vmatprep.subr.mxu0 0.0
    %1236 = vmatpush1.xpose.msra.mxu0 0.0
    %1237 = vmatprep.subr.mxu0 0.0
    %1238 = vmatpush1.xpose.msra.mxu0 0.0
    %1239 = vmatprep.subr.mxu0 0.0
    %1240 = vmatpush1.xpose.msra.mxu0 0.0
    %1241 = vmatprep.subr.mxu0 0.0
    %1242 = vmatpush1.xpose.msra.mxu0 0.0
    %1243 = vmatprep.subr.mxu0 0.0
    %1244 = vmatpush1.xpose.msra.mxu0 0.0
    %1245 = vmatprep.subr.mxu0 0.0
    %1246 = vmatpush1.xpose.msra.mxu0 0.0
    %1247 = vmatprep.subr.mxu0 0.0
    %1248 = vmatpush1.xpose.msra.mxu0 0.0
    %1249 = vmatprep.subr.mxu0 0.0
    %1250 = vmatpush1.xpose.msra.mxu0 0.0
    %1251 = vmatprep.subr.mxu0 0.0
    %1252 = vmatpush1.xpose.msra.mxu0 0.0
    %1253 = vmatprep.subr.mxu0 0.0
    %1254 = vmatpush1.xpose.msra.mxu0 0.0
    %1255 = vmatprep.subr.mxu0 0.0
    %1256 = vmatpush1.xpose.msra.mxu0 0.0
    %1257 = vmatprep.subr.mxu0 0.0
    %1258 = vmatpush1.xpose.msra.mxu0 0.0
    %1259 = vmatprep.subr.mxu0 0.0
    %1260 = vmatpush1.xpose.msra.mxu0 0.0
    %1261 = vmatprep.subr.mxu0 0.0
    %1262 = vmatpush1.xpose.msra.mxu0 0.0
    %1263 = vmatprep.subr.mxu0 0.0
    %1264 = vmatpush1.xpose.msra.mxu0 0.0
    %1265 = vmatprep.subr.mxu0 0.0
    %1266 = vmatpush1.xpose.msra.mxu0 0.0
    %1267 = vmatprep.mubr.f32.mxu0 %v992
    %1268 = vmatmul.mubr.f32.gmra.mrb[0].mxu0 %v990
    %v1269 = vpop.f32.mrb[0].mxu0
    %v1270 = vadd.f32 %v1200, %v1269
    %v1271 = vpop.f32.mrb[0].mxu0
    %1272 = vdwg.mxu0
    %1273 = vmatprep.subr.mxu0 %v906
    %1274 = vmatpush1.xpose.msra.mxu0 %v905
    %1275 = vmatprep.subr.mxu0 %v936
    %1276 = vmatpush1.xpose.msra.mxu0 %v935
    %1277 = vmatprep.subr.mxu0 0.0
    %1278 = vmatpush1.xpose.msra.mxu0 0.0
    %1279 = vmatprep.subr.mxu0 0.0
    %1280 = vmatpush1.xpose.msra.mxu0 0.0
    %1281 = vmatprep.subr.mxu0 0.0
    %1282 = vmatpush1.xpose.msra.mxu0 0.0
    %1283 = vmatprep.subr.mxu0 0.0
    %1284 = vmatpush1.xpose.msra.mxu0 0.0
    %1285 = vmatprep.subr.mxu0 0.0
    %1286 = vmatpush1.xpose.msra.mxu0 0.0
    %1287 = vmatprep.subr.mxu0 0.0
    %1288 = vmatpush1.xpose.msra.mxu0 0.0
    %1289 = vmatprep.subr.mxu0 0.0
    %1290 = vmatpush1.xpose.msra.mxu0 0.0
    %1291 = vmatprep.subr.mxu0 0.0
    %1292 = vmatpush1.xpose.msra.mxu0 0.0
    %1293 = vmatprep.subr.mxu0 0.0
    %1294 = vmatpush1.xpose.msra.mxu0 0.0
    %1295 = vmatprep.subr.mxu0 0.0
    %1296 = vmatpush1.xpose.msra.mxu0 0.0
    %1297 = vmatprep.subr.mxu0 0.0
    %1298 = vmatpush1.xpose.msra.mxu0 0.0
    %1299 = vmatprep.subr.mxu0 0.0
    %1300 = vmatpush1.xpose.msra.mxu0 0.0
    %1301 = vmatprep.subr.mxu0 0.0
    %1302 = vmatpush1.xpose.msra.mxu0 0.0
    %1303 = vmatprep.subr.mxu0 0.0
    %1304 = vmatpush1.xpose.msra.mxu0 0.0
    %1305 = vmatprep.subr.mxu0 0.0
    %1306 = vmatpush1.xpose.msra.mxu0 0.0
    %1307 = vmatprep.subr.mxu0 0.0
    %1308 = vmatpush1.xpose.msra.mxu0 0.0
    %1309 = vmatprep.subr.mxu0 0.0
    %1310 = vmatpush1.xpose.msra.mxu0 0.0
    %1311 = vmatprep.subr.mxu0 0.0
    %1312 = vmatpush1.xpose.msra.mxu0 0.0
    %1313 = vmatprep.subr.mxu0 0.0
    %1314 = vmatpush1.xpose.msra.mxu0 0.0
    %1315 = vmatprep.subr.mxu0 0.0
    %1316 = vmatpush1.xpose.msra.mxu0 0.0
    %1317 = vmatprep.subr.mxu0 0.0
    %1318 = vmatpush1.xpose.msra.mxu0 0.0
    %1319 = vmatprep.subr.mxu0 0.0
    %1320 = vmatpush1.xpose.msra.mxu0 0.0
    %1321 = vmatprep.subr.mxu0 0.0
    %1322 = vmatpush1.xpose.msra.mxu0 0.0
    %1323 = vmatprep.subr.mxu0 0.0
    %1324 = vmatpush1.xpose.msra.mxu0 0.0
    %1325 = vmatprep.subr.mxu0 0.0
    %1326 = vmatpush1.xpose.msra.mxu0 0.0
    %1327 = vmatprep.subr.mxu0 0.0
    %1328 = vmatpush1.xpose.msra.mxu0 0.0
    %1329 = vmatprep.subr.mxu0 0.0
    %1330 = vmatpush1.xpose.msra.mxu0 0.0
    %1331 = vmatprep.subr.mxu0 0.0
    %1332 = vmatpush1.xpose.msra.mxu0 0.0
    %1333 = vmatprep.subr.mxu0 0.0
    %1334 = vmatpush1.xpose.msra.mxu0 0.0
    %1335 = vmatprep.subr.mxu0 0.0
    %1336 = vmatpush1.xpose.msra.mxu0 0.0
    %1337 = vmatprep.mubr.f32.mxu0 %v1008
    %1338 = vmatmul.mubr.f32.gmra.mrb[0].mxu0 %v1000
    %v1339 = vpop.f32.mrb[0].mxu0
    %v1340 = vadd.f32 %v1270, %v1339
    %v1341 = vpop.f32.mrb[0].mxu0
    %1342 = vdwg.mxu0
    %1343 = vmatprep.subr.mxu0 %v908
    %1344 = vmatpush1.xpose.msra.mxu0 %v907
    %1345 = vmatprep.subr.mxu0 %v938
    %1346 = vmatpush1.xpose.msra.mxu0 %v937
    %1347 = vmatprep.subr.mxu0 0.0
    %1348 = vmatpush1.xpose.msra.mxu0 0.0
    %1349 = vmatprep.subr.mxu0 0.0
    %1350 = vmatpush1.xpose.msra.mxu0 0.0
    %1351 = vmatprep.subr.mxu0 0.0
    %1352 = vmatpush1.xpose.msra.mxu0 0.0
    %1353 = vmatprep.subr.mxu0 0.0
    %1354 = vmatpush1.xpose.msra.mxu0 0.0
    %1355 = vmatprep.subr.mxu0 0.0
    %1356 = vmatpush1.xpose.msra.mxu0 0.0
    %1357 = vmatprep.subr.mxu0 0.0
    %1358 = vmatpush1.xpose.msra.mxu0 0.0
    %1359 = vmatprep.subr.mxu0 0.0
    %1360 = vmatpush1.xpose.msra.mxu0 0.0
    %1361 = vmatprep.subr.mxu0 0.0
    %1362 = vmatpush1.xpose.msra.mxu0 0.0
    %1363 = vmatprep.subr.mxu0 0.0
    %1364 = vmatpush1.xpose.msra.mxu0 0.0
    %1365 = vmatprep.subr.mxu0 0.0
    %1366 = vmatpush1.xpose.msra.mxu0 0.0
    %1367 = vmatprep.subr.mxu0 0.0
    %1368 = vmatpush1.xpose.msra.mxu0 0.0
    %1369 = vmatprep.subr.mxu0 0.0
    %1370 = vmatpush1.xpose.msra.mxu0 0.0
    %1371 = vmatprep.subr.mxu0 0.0
    %1372 = vmatpush1.xpose.msra.mxu0 0.0
    %1373 = vmatprep.subr.mxu0 0.0
    %1374 = vmatpush1.xpose.msra.mxu0 0.0
    %1375 = vmatprep.subr.mxu0 0.0
    %1376 = vmatpush1.xpose.msra.mxu0 0.0
    %1377 = vmatprep.subr.mxu0 0.0
    %1378 = vmatpush1.xpose.msra.mxu0 0.0
    %1379 = vmatprep.subr.mxu0 0.0
    %1380 = vmatpush1.xpose.msra.mxu0 0.0
    %1381 = vmatprep.subr.mxu0 0.0
    %1382 = vmatpush1.xpose.msra.mxu0 0.0
    %1383 = vmatprep.subr.mxu0 0.0
    %1384 = vmatpush1.xpose.msra.mxu0 0.0
    %1385 = vmatprep.subr.mxu0 0.0
    %1386 = vmatpush1.xpose.msra.mxu0 0.0
    %1387 = vmatprep.subr.mxu0 0.0
    %1388 = vmatpush1.xpose.msra.mxu0 0.0
    %1389 = vmatprep.subr.mxu0 0.0
    %1390 = vmatpush1.xpose.msra.mxu0 0.0
    %1391 = vmatprep.subr.mxu0 0.0
    %1392 = vmatpush1.xpose.msra.mxu0 0.0
    %1393 = vmatprep.subr.mxu0 0.0
    %1394 = vmatpush1.xpose.msra.mxu0 0.0
    %1395 = vmatprep.subr.mxu0 0.0
    %1396 = vmatpush1.xpose.msra.mxu0 0.0
    %1397 = vmatprep.subr.mxu0 0.0
    %1398 = vmatpush1.xpose.msra.mxu0 0.0
    %1399 = vmatprep.subr.mxu0 0.0
    %1400 = vmatpush1.xpose.msra.mxu0 0.0
    %1401 = vmatprep.subr.mxu0 0.0
    %1402 = vmatpush1.xpose.msra.mxu0 0.0
    %1403 = vmatprep.subr.mxu0 0.0
    %1404 = vmatpush1.xpose.msra.mxu0 0.0
    %1405 = vmatprep.subr.mxu0 0.0
    %1406 = vmatpush1.xpose.msra.mxu0 0.0
    %1407 = vmatprep.mubr.f32.mxu0 %v1009
    %1408 = vmatmul.mubr.f32.gmra.mrb[0].mxu0 %v1007
    %v1409 = vpop.f32.mrb[0].mxu0
    %v1410 = vadd.f32 %v1340, %v1409
    %v1411 = vpop.f32.mrb[0].mxu0
    %1412 = vdwg.mxu0
    %1413 = vmatprep.subr.mxu0 %v910
    %1414 = vmatpush1.xpose.msra.mxu0 %v909
    %1415 = vmatprep.subr.mxu0 %v940
    %1416 = vmatpush1.xpose.msra.mxu0 %v939
    %1417 = vmatprep.subr.mxu0 0.0
    %1418 = vmatpush1.xpose.msra.mxu0 0.0
    %1419 = vmatprep.subr.mxu0 0.0
    %1420 = vmatpush1.xpose.msra.mxu0 0.0
    %1421 = vmatprep.subr.mxu0 0.0
    %1422 = vmatpush1.xpose.msra.mxu0 0.0
    %1423 = vmatprep.subr.mxu0 0.0
    %1424 = vmatpush1.xpose.msra.mxu0 0.0
    %1425 = vmatprep.subr.mxu0 0.0
    %1426 = vmatpush1.xpose.msra.mxu0 0.0
    %1427 = vmatprep.subr.mxu0 0.0
    %1428 = vmatpush1.xpose.msra.mxu0 0.0
    %1429 = vmatprep.subr.mxu0 0.0
    %1430 = vmatpush1.xpose.msra.mxu0 0.0
    %1431 = vmatprep.subr.mxu0 0.0
    %1432 = vmatpush1.xpose.msra.mxu0 0.0
    %1433 = vmatprep.subr.mxu0 0.0
    %1434 = vmatpush1.xpose.msra.mxu0 0.0
    %1435 = vmatprep.subr.mxu0 0.0
    %1436 = vmatpush1.xpose.msra.mxu0 0.0
    %1437 = vmatprep.subr.mxu0 0.0
    %1438 = vmatpush1.xpose.msra.mxu0 0.0
    %1439 = vmatprep.subr.mxu0 0.0
    %1440 = vmatpush1.xpose.msra.mxu0 0.0
    %1441 = vmatprep.subr.mxu0 0.0
    %1442 = vmatpush1.xpose.msra.mxu0 0.0
    %1443 = vmatprep.subr.mxu0 0.0
    %1444 = vmatpush1.xpose.msra.mxu0 0.0
    %1445 = vmatprep.subr.mxu0 0.0
    %1446 = vmatpush1.xpose.msra.mxu0 0.0
    %1447 = vmatprep.subr.mxu0 0.0
    %1448 = vmatpush1.xpose.msra.mxu0 0.0
    %1449 = vmatprep.subr.mxu0 0.0
    %1450 = vmatpush1.xpose.msra.mxu0 0.0
    %1451 = vmatprep.subr.mxu0 0.0
    %1452 = vmatpush1.xpose.msra.mxu0 0.0
    %1453 = vmatprep.subr.mxu0 0.0
    %1454 = vmatpush1.xpose.msra.mxu0 0.0
    %1455 = vmatprep.subr.mxu0 0.0
    %1456 = vmatpush1.xpose.msra.mxu0 0.0
    %1457 = vmatprep.subr.mxu0 0.0
    %1458 = vmatpush1.xpose.msra.mxu0 0.0
    %1459 = vmatprep.subr.mxu0 0.0
    %1460 = vmatpush1.xpose.msra.mxu0 0.0
    %1461 = vmatprep.subr.mxu0 0.0
    %1462 = vmatpush1.xpose.msra.mxu0 0.0
    %1463 = vmatprep.subr.mxu0 0.0
    %1464 = vmatpush1.xpose.msra.mxu0 0.0
    %1465 = vmatprep.subr.mxu0 0.0
    %1466 = vmatpush1.xpose.msra.mxu0 0.0
    %1467 = vmatprep.subr.mxu0 0.0
    %1468 = vmatpush1.xpose.msra.mxu0 0.0
    %1469 = vmatprep.subr.mxu0 0.0
    %1470 = vmatpush1.xpose.msra.mxu0 0.0
    %1471 = vmatprep.subr.mxu0 0.0
    %1472 = vmatpush1.xpose.msra.mxu0 0.0
    %1473 = vmatprep.subr.mxu0 0.0
    %1474 = vmatpush1.xpose.msra.mxu0 0.0
    %1475 = vmatprep.subr.mxu0 0.0
    %1476 = vmatpush1.xpose.msra.mxu0 0.0
    %1477 = vmatprep.mubr.f32.mxu0 %v1025
    %1478 = vmatmul.mubr.f32.gmra.mrb[0].mxu0 %v1017
    %v1479 = vpop.f32.mrb[0].mxu0
    %v1480 = vadd.f32 %v1410, %v1479
    %v1481 = vpop.f32.mrb[0].mxu0
    %1482 = vdwg.mxu0
    %1483 = vmatprep.subr.mxu0 %v912
    %1484 = vmatpush1.xpose.msra.mxu0 %v911
    %1485 = vmatprep.subr.mxu0 %v942
    %1486 = vmatpush1.xpose.msra.mxu0 %v941
    %1487 = vmatprep.subr.mxu0 0.0
    %1488 = vmatpush1.xpose.msra.mxu0 0.0
    %1489 = vmatprep.subr.mxu0 0.0
    %1490 = vmatpush1.xpose.msra.mxu0 0.0
    %1491 = vmatprep.subr.mxu0 0.0
    %1492 = vmatpush1.xpose.msra.mxu0 0.0
    %1493 = vmatprep.subr.mxu0 0.0
    %1494 = vmatpush1.xpose.msra.mxu0 0.0
    %1495 = vmatprep.subr.mxu0 0.0
    %1496 = vmatpush1.xpose.msra.mxu0 0.0
    %1497 = vmatprep.subr.mxu0 0.0
    %1498 = vmatpush1.xpose.msra.mxu0 0.0
    %1499 = vmatprep.subr.mxu0 0.0
    %1500 = vmatpush1.xpose.msra.mxu0 0.0
    %1501 = vmatprep.subr.mxu0 0.0
    %1502 = vmatpush1.xpose.msra.mxu0 0.0
    %1503 = vmatprep.subr.mxu0 0.0
    %1504 = vmatpush1.xpose.msra.mxu0 0.0
    %1505 = vmatprep.subr.mxu0 0.0
    %1506 = vmatpush1.xpose.msra.mxu0 0.0
    %1507 = vmatprep.subr.mxu0 0.0
    %1508 = vmatpush1.xpose.msra.mxu0 0.0
    %1509 = vmatprep.subr.mxu0 0.0
    %1510 = vmatpush1.xpose.msra.mxu0 0.0
    %1511 = vmatprep.subr.mxu0 0.0
    %1512 = vmatpush1.xpose.msra.mxu0 0.0
    %1513 = vmatprep.subr.mxu0 0.0
    %1514 = vmatpush1.xpose.msra.mxu0 0.0
    %1515 = vmatprep.subr.mxu0 0.0
    %1516 = vmatpush1.xpose.msra.mxu0 0.0
    %1517 = vmatprep.subr.mxu0 0.0
    %1518 = vmatpush1.xpose.msra.mxu0 0.0
    %1519 = vmatprep.subr.mxu0 0.0
    %1520 = vmatpush1.xpose.msra.mxu0 0.0
    %1521 = vmatprep.subr.mxu0 0.0
    %1522 = vmatpush1.xpose.msra.mxu0 0.0
    %1523 = vmatprep.subr.mxu0 0.0
    %1524 = vmatpush1.xpose.msra.mxu0 0.0
    %1525 = vmatprep.subr.mxu0 0.0
    %1526 = vmatpush1.xpose.msra.mxu0 0.0
    %1527 = vmatprep.subr.mxu0 0.0
    %1528 = vmatpush1.xpose.msra.mxu0 0.0
    %1529 = vmatprep.subr.mxu0 0.0
    %1530 = vmatpush1.xpose.msra.mxu0 0.0
    %1531 = vmatprep.subr.mxu0 0.0
    %1532 = vmatpush1.xpose.msra.mxu0 0.0
    %1533 = vmatprep.subr.mxu0 0.0
    %1534 = vmatpush1.xpose.msra.mxu0 0.0
    %1535 = vmatprep.subr.mxu0 0.0
    %1536 = vmatpush1.xpose.msra.mxu0 0.0
    %1537 = vmatprep.subr.mxu0 0.0
    %1538 = vmatpush1.xpose.msra.mxu0 0.0
    %1539 = vmatprep.subr.mxu0 0.0
    %1540 = vmatpush1.xpose.msra.mxu0 0.0
    %1541 = vmatprep.subr.mxu0 0.0
    %1542 = vmatpush1.xpose.msra.mxu0 0.0
    %1543 = vmatprep.subr.mxu0 0.0
    %1544 = vmatpush1.xpose.msra.mxu0 0.0
    %1545 = vmatprep.subr.mxu0 0.0
    %1546 = vmatpush1.xpose.msra.mxu0 0.0
    %1547 = vmatprep.mubr.f32.mxu0 %v1026
    %1548 = vmatmul.mubr.f32.gmra.mrb[0].mxu0 %v1024
    %v1549 = vpop.f32.mrb[0].mxu0
    %v1550 = vadd.f32 %v1480, %v1549
    %v1551 = vpop.f32.mrb[0].mxu0
    %1552 = vdwg.mxu0
    %1553 = vmatprep.subr.mxu0 %v914
    %1554 = vmatpush1.xpose.msra.mxu0 %v913
    %1555 = vmatprep.subr.mxu0 %v944
    %1556 = vmatpush1.xpose.msra.mxu0 %v943
    %1557 = vmatprep.subr.mxu0 0.0
    %1558 = vmatpush1.xpose.msra.mxu0 0.0
    %1559 = vmatprep.subr.mxu0 0.0
    %1560 = vmatpush1.xpose.msra.mxu0 0.0
    %1561 = vmatprep.subr.mxu0 0.0
    %1562 = vmatpush1.xpose.msra.mxu0 0.0
    %1563 = vmatprep.subr.mxu0 0.0
    %1564 = vmatpush1.xpose.msra.mxu0 0.0
    %1565 = vmatprep.subr.mxu0 0.0
    %1566 = vmatpush1.xpose.msra.mxu0 0.0
    %1567 = vmatprep.subr.mxu0 0.0
    %1568 = vmatpush1.xpose.msra.mxu0 0.0
    %1569 = vmatprep.subr.mxu0 0.0
    %1570 = vmatpush1.xpose.msra.mxu0 0.0
    %1571 = vmatprep.subr.mxu0 0.0
    %1572 = vmatpush1.xpose.msra.mxu0 0.0
    %1573 = vmatprep.subr.mxu0 0.0
    %1574 = vmatpush1.xpose.msra.mxu0 0.0
    %1575 = vmatprep.subr.mxu0 0.0
    %1576 = vmatpush1.xpose.msra.mxu0 0.0
    %1577 = vmatprep.subr.mxu0 0.0
    %1578 = vmatpush1.xpose.msra.mxu0 0.0
    %1579 = vmatprep.subr.mxu0 0.0
    %1580 = vmatpush1.xpose.msra.mxu0 0.0
    %1581 = vmatprep.subr.mxu0 0.0
    %1582 = vmatpush1.xpose.msra.mxu0 0.0
    %1583 = vmatprep.subr.mxu0 0.0
    %1584 = vmatpush1.xpose.msra.mxu0 0.0
    %1585 = vmatprep.subr.mxu0 0.0
    %1586 = vmatpush1.xpose.msra.mxu0 0.0
    %1587 = vmatprep.subr.mxu0 0.0
    %1588 = vmatpush1.xpose.msra.mxu0 0.0
    %1589 = vmatprep.subr.mxu0 0.0
    %1590 = vmatpush1.xpose.msra.mxu0 0.0
    %1591 = vmatprep.subr.mxu0 0.0
    %1592 = vmatpush1.xpose.msra.mxu0 0.0
    %1593 = vmatprep.subr.mxu0 0.0
    %1594 = vmatpush1.xpose.msra.mxu0 0.0
    %1595 = vmatprep.subr.mxu0 0.0
    %1596 = vmatpush1.xpose.msra.mxu0 0.0
    %1597 = vmatprep.subr.mxu0 0.0
    %1598 = vmatpush1.xpose.msra.mxu0 0.0
    %1599 = vmatprep.subr.mxu0 0.0
    %1600 = vmatpush1.xpose.msra.mxu0 0.0
    %1601 = vmatprep.subr.mxu0 0.0
    %1602 = vmatpush1.xpose.msra.mxu0 0.0
    %1603 = vmatprep.subr.mxu0 0.0
    %1604 = vmatpush1.xpose.msra.mxu0 0.0
    %1605 = vmatprep.subr.mxu0 0.0
    %1606 = vmatpush1.xpose.msra.mxu0 0.0
    %1607 = vmatprep.subr.mxu0 0.0
    %1608 = vmatpush1.xpose.msra.mxu0 0.0
    %1609 = vmatprep.subr.mxu0 0.0
    %1610 = vmatpush1.xpose.msra.mxu0 0.0
    %1611 = vmatprep.subr.mxu0 0.0
    %1612 = vmatpush1.xpose.msra.mxu0 0.0
    %1613 = vmatprep.subr.mxu0 0.0
    %1614 = vmatpush1.xpose.msra.mxu0 0.0
    %1615 = vmatprep.subr.mxu0 0.0
    %1616 = vmatpush1.xpose.msra.mxu0 0.0
    %1617 = vmatprep.mubr.f32.mxu0 %v1042
    %1618 = vmatmul.mubr.f32.gmra.mrb[0].mxu0 %v1034
    %v1619 = vpop.f32.mrb[0].mxu0
    %v1620 = vadd.f32 %v1550, %v1619
    %v1621 = vpop.f32.mrb[0].mxu0
    %1622 = vdwg.mxu0
    %1623 = vmatprep.subr.mxu0 %v916
    %1624 = vmatpush1.xpose.msra.mxu0 %v915
    %1625 = vmatprep.subr.mxu0 %v946
    %1626 = vmatpush1.xpose.msra.mxu0 %v945
    %1627 = vmatprep.subr.mxu0 0.0
    %1628 = vmatpush1.xpose.msra.mxu0 0.0
    %1629 = vmatprep.subr.mxu0 0.0
    %1630 = vmatpush1.xpose.msra.mxu0 0.0
    %1631 = vmatprep.subr.mxu0 0.0
    %1632 = vmatpush1.xpose.msra.mxu0 0.0
    %1633 = vmatprep.subr.mxu0 0.0
    %1634 = vmatpush1.xpose.msra.mxu0 0.0
    %1635 = vmatprep.subr.mxu0 0.0
    %1636 = vmatpush1.xpose.msra.mxu0 0.0
    %1637 = vmatprep.subr.mxu0 0.0
    %1638 = vmatpush1.xpose.msra.mxu0 0.0
    %1639 = vmatprep.subr.mxu0 0.0
    %1640 = vmatpush1.xpose.msra.mxu0 0.0
    %1641 = vmatprep.subr.mxu0 0.0
    %1642 = vmatpush1.xpose.msra.mxu0 0.0
    %1643 = vmatprep.subr.mxu0 0.0
    %1644 = vmatpush1.xpose.msra.mxu0 0.0
    %1645 = vmatprep.subr.mxu0 0.0
    %1646 = vmatpush1.xpose.msra.mxu0 0.0
    %1647 = vmatprep.subr.mxu0 0.0
    %1648 = vmatpush1.xpose.msra.mxu0 0.0
    %1649 = vmatprep.subr.mxu0 0.0
    %1650 = vmatpush1.xpose.msra.mxu0 0.0
    %1651 = vmatprep.subr.mxu0 0.0
    %1652 = vmatpush1.xpose.msra.mxu0 0.0
    %1653 = vmatprep.subr.mxu0 0.0
    %1654 = vmatpush1.xpose.msra.mxu0 0.0
    %1655 = vmatprep.subr.mxu0 0.0
    %1656 = vmatpush1.xpose.msra.mxu0 0.0
    %1657 = vmatprep.subr.mxu0 0.0
    %1658 = vmatpush1.xpose.msra.mxu0 0.0
    %1659 = vmatprep.subr.mxu0 0.0
    %1660 = vmatpush1.xpose.msra.mxu0 0.0
    %1661 = vmatprep.subr.mxu0 0.0
    %1662 = vmatpush1.xpose.msra.mxu0 0.0
    %1663 = vmatprep.subr.mxu0 0.0
    %1664 = vmatpush1.xpose.msra.mxu0 0.0
    %1665 = vmatprep.subr.mxu0 0.0
    %1666 = vmatpush1.xpose.msra.mxu0 0.0
    %1667 = vmatprep.subr.mxu0 0.0
    %1668 = vmatpush1.xpose.msra.mxu0 0.0
    %1669 = vmatprep.subr.mxu0 0.0
    %1670 = vmatpush1.xpose.msra.mxu0 0.0
    %1671 = vmatprep.subr.mxu0 0.0
    %1672 = vmatpush1.xpose.msra.mxu0 0.0
    %1673 = vmatprep.subr.mxu0 0.0
    %1674 = vmatpush1.xpose.msra.mxu0 0.0
    %1675 = vmatprep.subr.mxu0 0.0
    %1676 = vmatpush1.xpose.msra.mxu0 0.0
    %1677 = vmatprep.subr.mxu0 0.0
    %1678 = vmatpush1.xpose.msra.mxu0 0.0
    %1679 = vmatprep.subr.mxu0 0.0
    %1680 = vmatpush1.xpose.msra.mxu0 0.0
    %1681 = vmatprep.subr.mxu0 0.0
    %1682 = vmatpush1.xpose.msra.mxu0 0.0
    %1683 = vmatprep.subr.mxu0 0.0
    %1684 = vmatpush1.xpose.msra.mxu0 0.0
    %1685 = vmatprep.subr.mxu0 0.0
    %1686 = vmatpush1.xpose.msra.mxu0 0.0
    %1687 = vmatprep.mubr.f32.mxu0 %v1043
    %1688 = vmatmul.mubr.f32.gmra.mrb[0].mxu0 %v1041
    %v1689 = vpop.f32.mrb[0].mxu0
    %v1690 = vadd.f32 %v1620, %v1689
    %v1691 = vpop.f32.mrb[0].mxu0
    %1692 = vdwg.mxu0
    %1693 = vmatprep.subr.mxu0 %v918
    %1694 = vmatpush1.xpose.msra.mxu0 %v917
    %1695 = vmatprep.subr.mxu0 %v948
    %1696 = vmatpush1.xpose.msra.mxu0 %v947
    %1697 = vmatprep.subr.mxu0 0.0
    %1698 = vmatpush1.xpose.msra.mxu0 0.0
    %1699 = vmatprep.subr.mxu0 0.0
    %1700 = vmatpush1.xpose.msra.mxu0 0.0
    %1701 = vmatprep.subr.mxu0 0.0
    %1702 = vmatpush1.xpose.msra.mxu0 0.0
    %1703 = vmatprep.subr.mxu0 0.0
    %1704 = vmatpush1.xpose.msra.mxu0 0.0
    %1705 = vmatprep.subr.mxu0 0.0
    %1706 = vmatpush1.xpose.msra.mxu0 0.0
    %1707 = vmatprep.subr.mxu0 0.0
    %1708 = vmatpush1.xpose.msra.mxu0 0.0
    %1709 = vmatprep.subr.mxu0 0.0
    %1710 = vmatpush1.xpose.msra.mxu0 0.0
    %1711 = vmatprep.subr.mxu0 0.0
    %1712 = vmatpush1.xpose.msra.mxu0 0.0
    %1713 = vmatprep.subr.mxu0 0.0
    %1714 = vmatpush1.xpose.msra.mxu0 0.0
    %1715 = vmatprep.subr.mxu0 0.0
    %1716 = vmatpush1.xpose.msra.mxu0 0.0
    %1717 = vmatprep.subr.mxu0 0.0
    %1718 = vmatpush1.xpose.msra.mxu0 0.0
    %1719 = vmatprep.subr.mxu0 0.0
    %1720 = vmatpush1.xpose.msra.mxu0 0.0
    %1721 = vmatprep.subr.mxu0 0.0
    %1722 = vmatpush1.xpose.msra.mxu0 0.0
    %1723 = vmatprep.subr.mxu0 0.0
    %1724 = vmatpush1.xpose.msra.mxu0 0.0
    %1725 = vmatprep.subr.mxu0 0.0
    %1726 = vmatpush1.xpose.msra.mxu0 0.0
    %1727 = vmatprep.subr.mxu0 0.0
    %1728 = vmatpush1.xpose.msra.mxu0 0.0
    %1729 = vmatprep.subr.mxu0 0.0
    %1730 = vmatpush1.xpose.msra.mxu0 0.0
    %1731 = vmatprep.subr.mxu0 0.0
    %1732 = vmatpush1.xpose.msra.mxu0 0.0
    %1733 = vmatprep.subr.mxu0 0.0
    %1734 = vmatpush1.xpose.msra.mxu0 0.0
    %1735 = vmatprep.subr.mxu0 0.0
    %1736 = vmatpush1.xpose.msra.mxu0 0.0
    %1737 = vmatprep.subr.mxu0 0.0
    %1738 = vmatpush1.xpose.msra.mxu0 0.0
    %1739 = vmatprep.subr.mxu0 0.0
    %1740 = vmatpush1.xpose.msra.mxu0 0.0
    %1741 = vmatprep.subr.mxu0 0.0
    %1742 = vmatpush1.xpose.msra.mxu0 0.0
    %1743 = vmatprep.subr.mxu0 0.0
    %1744 = vmatpush1.xpose.msra.mxu0 0.0
    %1745 = vmatprep.subr.mxu0 0.0
    %1746 = vmatpush1.xpose.msra.mxu0 0.0
    %1747 = vmatprep.subr.mxu0 0.0
    %1748 = vmatpush1.xpose.msra.mxu0 0.0
    %1749 = vmatprep.subr.mxu0 0.0
    %1750 = vmatpush1.xpose.msra.mxu0 0.0
    %1751 = vmatprep.subr.mxu0 0.0
    %1752 = vmatpush1.xpose.msra.mxu0 0.0
    %1753 = vmatprep.subr.mxu0 0.0
    %1754 = vmatpush1.xpose.msra.mxu0 0.0
    %1755 = vmatprep.subr.mxu0 0.0
    %1756 = vmatpush1.xpose.msra.mxu0 0.0
    %1757 = vmatprep.mubr.f32.mxu0 %v1059
    %1758 = vmatmul.mubr.f32.gmra.mrb[0].mxu0 %v1051
    %v1759 = vpop.f32.mrb[0].mxu0
    %v1760 = vadd.f32 %v1690, %v1759
    %v1761 = vpop.f32.mrb[0].mxu0
    %1762 = vdwg.mxu0
    %1763 = vmatprep.subr.mxu0 %v920
    %1764 = vmatpush1.xpose.msra.mxu0 %v919
    %1765 = vmatprep.subr.mxu0 %v950
    %1766 = vmatpush1.xpose.msra.mxu0 %v949
    %1767 = vmatprep.subr.mxu0 0.0
    %1768 = vmatpush1.xpose.msra.mxu0 0.0
    %1769 = vmatprep.subr.mxu0 0.0
    %1770 = vmatpush1.xpose.msra.mxu0 0.0
    %1771 = vmatprep.subr.mxu0 0.0
    %1772 = vmatpush1.xpose.msra.mxu0 0.0
    %1773 = vmatprep.subr.mxu0 0.0
    %1774 = vmatpush1.xpose.msra.mxu0 0.0
    %1775 = vmatprep.subr.mxu0 0.0
    %1776 = vmatpush1.xpose.msra.mxu0 0.0
    %1777 = vmatprep.subr.mxu0 0.0
    %1778 = vmatpush1.xpose.msra.mxu0 0.0
    %1779 = vmatprep.subr.mxu0 0.0
    %1780 = vmatpush1.xpose.msra.mxu0 0.0
    %1781 = vmatprep.subr.mxu0 0.0
    %1782 = vmatpush1.xpose.msra.mxu0 0.0
    %1783 = vmatprep.subr.mxu0 0.0
    %1784 = vmatpush1.xpose.msra.mxu0 0.0
    %1785 = vmatprep.subr.mxu0 0.0
    %1786 = vmatpush1.xpose.msra.mxu0 0.0
    %1787 = vmatprep.subr.mxu0 0.0
    %1788 = vmatpush1.xpose.msra.mxu0 0.0
    %1789 = vmatprep.subr.mxu0 0.0
    %1790 = vmatpush1.xpose.msra.mxu0 0.0
    %1791 = vmatprep.subr.mxu0 0.0
    %1792 = vmatpush1.xpose.msra.mxu0 0.0
    %1793 = vmatprep.subr.mxu0 0.0
    %1794 = vmatpush1.xpose.msra.mxu0 0.0
    %1795 = vmatprep.subr.mxu0 0.0
    %1796 = vmatpush1.xpose.msra.mxu0 0.0
    %1797 = vmatprep.subr.mxu0 0.0
    %1798 = vmatpush1.xpose.msra.mxu0 0.0
    %1799 = vmatprep.subr.mxu0 0.0
    %1800 = vmatpush1.xpose.msra.mxu0 0.0
    %1801 = vmatprep.subr.mxu0 0.0
    %1802 = vmatpush1.xpose.msra.mxu0 0.0
    %1803 = vmatprep.subr.mxu0 0.0
    %1804 = vmatpush1.xpose.msra.mxu0 0.0
    %1805 = vmatprep.subr.mxu0 0.0
    %1806 = vmatpush1.xpose.msra.mxu0 0.0
    %1807 = vmatprep.subr.mxu0 0.0
    %1808 = vmatpush1.xpose.msra.mxu0 0.0
    %1809 = vmatprep.subr.mxu0 0.0
    %1810 = vmatpush1.xpose.msra.mxu0 0.0
    %1811 = vmatprep.subr.mxu0 0.0
    %1812 = vmatpush1.xpose.msra.mxu0 0.0
    %1813 = vmatprep.subr.mxu0 0.0
    %1814 = vmatpush1.xpose.msra.mxu0 0.0
    %1815 = vmatprep.subr.mxu0 0.0
    %1816 = vmatpush1.xpose.msra.mxu0 0.0
    %1817 = vmatprep.subr.mxu0 0.0
    %1818 = vmatpush1.xpose.msra.mxu0 0.0
    %1819 = vmatprep.subr.mxu0 0.0
    %1820 = vmatpush1.xpose.msra.mxu0 0.0
    %1821 = vmatprep.subr.mxu0 0.0
    %1822 = vmatpush1.xpose.msra.mxu0 0.0
    %1823 = vmatprep.subr.mxu0 0.0
    %1824 = vmatpush1.xpose.msra.mxu0 0.0
    %1825 = vmatprep.subr.mxu0 0.0
    %1826 = vmatpush1.xpose.msra.mxu0 0.0
    %1827 = vmatprep.mubr.f32.mxu0 %v1060
    %1828 = vmatmul.mubr.f32.gmra.mrb[0].mxu0 %v1058
    %v1829 = vpop.f32.mrb[0].mxu0
    %v1830 = vadd.f32 %v1760, %v1829
    %v1831 = vpop.f32.mrb[0].mxu0
    %1832 = vdwg.mxu0
    %1833 = vmatprep.subr.mxu0 %v922
    %1834 = vmatpush1.xpose.msra.mxu0 %v921
    %1835 = vmatprep.subr.mxu0 %v952
    %1836 = vmatpush1.xpose.msra.mxu0 %v951
    %1837 = vmatprep.subr.mxu0 0.0
    %1838 = vmatpush1.xpose.msra.mxu0 0.0
    %1839 = vmatprep.subr.mxu0 0.0
    %1840 = vmatpush1.xpose.msra.mxu0 0.0
    %1841 = vmatprep.subr.mxu0 0.0
    %1842 = vmatpush1.xpose.msra.mxu0 0.0
    %1843 = vmatprep.subr.mxu0 0.0
    %1844 = vmatpush1.xpose.msra.mxu0 0.0
    %1845 = vmatprep.subr.mxu0 0.0
    %1846 = vmatpush1.xpose.msra.mxu0 0.0
    %1847 = vmatprep.subr.mxu0 0.0
    %1848 = vmatpush1.xpose.msra.mxu0 0.0
    %1849 = vmatprep.subr.mxu0 0.0
    %1850 = vmatpush1.xpose.msra.mxu0 0.0
    %1851 = vmatprep.subr.mxu0 0.0
    %1852 = vmatpush1.xpose.msra.mxu0 0.0
    %1853 = vmatprep.subr.mxu0 0.0
    %1854 = vmatpush1.xpose.msra.mxu0 0.0
    %1855 = vmatprep.subr.mxu0 0.0
    %1856 = vmatpush1.xpose.msra.mxu0 0.0
    %1857 = vmatprep.subr.mxu0 0.0
    %1858 = vmatpush1.xpose.msra.mxu0 0.0
    %1859 = vmatprep.subr.mxu0 0.0
    %1860 = vmatpush1.xpose.msra.mxu0 0.0
    %1861 = vmatprep.subr.mxu0 0.0
    %1862 = vmatpush1.xpose.msra.mxu0 0.0
    %1863 = vmatprep.subr.mxu0 0.0
    %1864 = vmatpush1.xpose.msra.mxu0 0.0
    %1865 = vmatprep.subr.mxu0 0.0
    %1866 = vmatpush1.xpose.msra.mxu0 0.0
    %1867 = vmatprep.subr.mxu0 0.0
    %1868 = vmatpush1.xpose.msra.mxu0 0.0
    %1869 = vmatprep.subr.mxu0 0.0
    %1870 = vmatpush1.xpose.msra.mxu0 0.0
    %1871 = vmatprep.subr.mxu0 0.0
    %1872 = vmatpush1.xpose.msra.mxu0 0.0
    %1873 = vmatprep.subr.mxu0 0.0
    %1874 = vmatpush1.xpose.msra.mxu0 0.0
    %1875 = vmatprep.subr.mxu0 0.0
    %1876 = vmatpush1.xpose.msra.mxu0 0.0
    %1877 = vmatprep.subr.mxu0 0.0
    %1878 = vmatpush1.xpose.msra.mxu0 0.0
    %1879 = vmatprep.subr.mxu0 0.0
    %1880 = vmatpush1.xpose.msra.mxu0 0.0
    %1881 = vmatprep.subr.mxu0 0.0
    %1882 = vmatpush1.xpose.msra.mxu0 0.0
    %1883 = vmatprep.subr.mxu0 0.0
    %1884 = vmatpush1.xpose.msra.mxu0 0.0
    %1885 = vmatprep.subr.mxu0 0.0
    %1886 = vmatpush1.xpose.msra.mxu0 0.0
    %1887 = vmatprep.subr.mxu0 0.0
    %1888 = vmatpush1.xpose.msra.mxu0 0.0
    %1889 = vmatprep.subr.mxu0 0.0
    %1890 = vmatpush1.xpose.msra.mxu0 0.0
    %1891 = vmatprep.subr.mxu0 0.0
    %1892 = vmatpush1.xpose.msra.mxu0 0.0
    %1893 = vmatprep.subr.mxu0 0.0
    %1894 = vmatpush1.xpose.msra.mxu0 0.0
    %1895 = vmatprep.subr.mxu0 0.0
    %1896 = vmatpush1.xpose.msra.mxu0 0.0
    %1897 = vmatprep.mubr.f32.mxu0 %v1076
    %1898 = vmatmul.mubr.f32.gmra.mrb[0].mxu0 %v1068
    %v1899 = vpop.f32.mrb[0].mxu0
    %v1900 = vadd.f32 %v1830, %v1899
    %v1901 = vpop.f32.mrb[0].mxu0
    %1902 = vdwg.mxu0
    %1903 = vmatprep.subr.mxu0 %v924
    %1904 = vmatpush1.xpose.msra.mxu0 %v923
    %1905 = vmatprep.subr.mxu0 %v954
    %1906 = vmatpush1.xpose.msra.mxu0 %v953
    %1907 = vmatprep.subr.mxu0 0.0
    %1908 = vmatpush1.xpose.msra.mxu0 0.0
    %1909 = vmatprep.subr.mxu0 0.0
    %1910 = vmatpush1.xpose.msra.mxu0 0.0
    %1911 = vmatprep.subr.mxu0 0.0
    %1912 = vmatpush1.xpose.msra.mxu0 0.0
    %1913 = vmatprep.subr.mxu0 0.0
    %1914 = vmatpush1.xpose.msra.mxu0 0.0
    %1915 = vmatprep.subr.mxu0 0.0
    %1916 = vmatpush1.xpose.msra.mxu0 0.0
    %1917 = vmatprep.subr.mxu0 0.0
    %1918 = vmatpush1.xpose.msra.mxu0 0.0
    %1919 = vmatprep.subr.mxu0 0.0
    %1920 = vmatpush1.xpose.msra.mxu0 0.0
    %1921 = vmatprep.subr.mxu0 0.0
    %1922 = vmatpush1.xpose.msra.mxu0 0.0
    %1923 = vmatprep.subr.mxu0 0.0
    %1924 = vmatpush1.xpose.msra.mxu0 0.0
    %1925 = vmatprep.subr.mxu0 0.0
    %1926 = vmatpush1.xpose.msra.mxu0 0.0
    %1927 = vmatprep.subr.mxu0 0.0
    %1928 = vmatpush1.xpose.msra.mxu0 0.0
    %1929 = vmatprep.subr.mxu0 0.0
    %1930 = vmatpush1.xpose.msra.mxu0 0.0
    %1931 = vmatprep.subr.mxu0 0.0
    %1932 = vmatpush1.xpose.msra.mxu0 0.0
    %1933 = vmatprep.subr.mxu0 0.0
    %1934 = vmatpush1.xpose.msra.mxu0 0.0
    %1935 = vmatprep.subr.mxu0 0.0
    %1936 = vmatpush1.xpose.msra.mxu0 0.0
    %1937 = vmatprep.subr.mxu0 0.0
    %1938 = vmatpush1.xpose.msra.mxu0 0.0
    %1939 = vmatprep.subr.mxu0 0.0
    %1940 = vmatpush1.xpose.msra.mxu0 0.0
    %1941 = vmatprep.subr.mxu0 0.0
    %1942 = vmatpush1.xpose.msra.mxu0 0.0
    %1943 = vmatprep.subr.mxu0 0.0
    %1944 = vmatpush1.xpose.msra.mxu0 0.0
    %1945 = vmatprep.subr.mxu0 0.0
    %1946 = vmatpush1.xpose.msra.mxu0 0.0
    %1947 = vmatprep.subr.mxu0 0.0
    %1948 = vmatpush1.xpose.msra.mxu0 0.0
    %1949 = vmatprep.subr.mxu0 0.0
    %1950 = vmatpush1.xpose.msra.mxu0 0.0
    %1951 = vmatprep.subr.mxu0 0.0
    %1952 = vmatpush1.xpose.msra.mxu0 0.0
    %1953 = vmatprep.subr.mxu0 0.0
    %1954 = vmatpush1.xpose.msra.mxu0 0.0
    %1955 = vmatprep.subr.mxu0 0.0
    %1956 = vmatpush1.xpose.msra.mxu0 0.0
    %1957 = vmatprep.subr.mxu0 0.0
    %1958 = vmatpush1.xpose.msra.mxu0 0.0
    %1959 = vmatprep.subr.mxu0 0.0
    %1960 = vmatpush1.xpose.msra.mxu0 0.0
    %1961 = vmatprep.subr.mxu0 0.0
    %1962 = vmatpush1.xpose.msra.mxu0 0.0
    %1963 = vmatprep.subr.mxu0 0.0
    %1964 = vmatpush1.xpose.msra.mxu0 0.0
    %1965 = vmatprep.subr.mxu0 0.0
    %1966 = vmatpush1.xpose.msra.mxu0 0.0
    %1967 = vmatprep.mubr.f32.mxu0 %v1077
    %1968 = vmatmul.mubr.f32.gmra.mrb[0].mxu0 %v1075
    %v1969 = vpop.f32.mrb[0].mxu0
    %v1970 = vadd.f32 %v1900, %v1969
    %v1971 = vpop.f32.mrb[0].mxu0
    %1972 = vdwg.mxu0
    %1973 = vmatprep.subr.mxu0 %v926
    %1974 = vmatpush1.xpose.msra.mxu0 %v925
    %1975 = vmatprep.subr.mxu0 %v956
    %1976 = vmatpush1.xpose.msra.mxu0 %v955
    %1977 = vmatprep.subr.mxu0 0.0
    %1978 = vmatpush1.xpose.msra.mxu0 0.0
    %1979 = vmatprep.subr.mxu0 0.0
    %1980 = vmatpush1.xpose.msra.mxu0 0.0
    %1981 = vmatprep.subr.mxu0 0.0
    %1982 = vmatpush1.xpose.msra.mxu0 0.0
    %1983 = vmatprep.subr.mxu0 0.0
    %1984 = vmatpush1.xpose.msra.mxu0 0.0
    %1985 = vmatprep.subr.mxu0 0.0
    %1986 = vmatpush1.xpose.msra.mxu0 0.0
    %1987 = vmatprep.subr.mxu0 0.0
    %1988 = vmatpush1.xpose.msra.mxu0 0.0
    %1989 = vmatprep.subr.mxu0 0.0
    %1990 = vmatpush1.xpose.msra.mxu0 0.0
    %1991 = vmatprep.subr.mxu0 0.0
    %1992 = vmatpush1.xpose.msra.mxu0 0.0
    %1993 = vmatprep.subr.mxu0 0.0
    %1994 = vmatpush1.xpose.msra.mxu0 0.0
    %1995 = vmatprep.subr.mxu0 0.0
    %1996 = vmatpush1.xpose.msra.mxu0 0.0
    %1997 = vmatprep.subr.mxu0 0.0
    %1998 = vmatpush1.xpose.msra.mxu0 0.0
    %1999 = vmatprep.subr.mxu0 0.0
    %2000 = vmatpush1.xpose.msra.mxu0 0.0
    %2001 = vmatprep.subr.mxu0 0.0
    %2002 = vmatpush1.xpose.msra.mxu0 0.0
    %2003 = vmatprep.subr.mxu0 0.0
    %2004 = vmatpush1.xpose.msra.mxu0 0.0
    %2005 = vmatprep.subr.mxu0 0.0
    %2006 = vmatpush1.xpose.msra.mxu0 0.0
    %2007 = vmatprep.subr.mxu0 0.0
    %2008 = vmatpush1.xpose.msra.mxu0 0.0
    %2009 = vmatprep.subr.mxu0 0.0
    %2010 = vmatpush1.xpose.msra.mxu0 0.0
    %2011 = vmatprep.subr.mxu0 0.0
    %2012 = vmatpush1.xpose.msra.mxu0 0.0
    %2013 = vmatprep.subr.mxu0 0.0
    %2014 = vmatpush1.xpose.msra.mxu0 0.0
    %2015 = vmatprep.subr.mxu0 0.0
    %2016 = vmatpush1.xpose.msra.mxu0 0.0
    %2017 = vmatprep.subr.mxu0 0.0
    %2018 = vmatpush1.xpose.msra.mxu0 0.0
    %2019 = vmatprep.subr.mxu0 0.0
    %2020 = vmatpush1.xpose.msra.mxu0 0.0
    %2021 = vmatprep.subr.mxu0 0.0
    %2022 = vmatpush1.xpose.msra.mxu0 0.0
    %2023 = vmatprep.subr.mxu0 0.0
    %2024 = vmatpush1.xpose.msra.mxu0 0.0
    %2025 = vmatprep.subr.mxu0 0.0
    %2026 = vmatpush1.xpose.msra.mxu0 0.0
    %2027 = vmatprep.subr.mxu0 0.0
    %2028 = vmatpush1.xpose.msra.mxu0 0.0
    %2029 = vmatprep.subr.mxu0 0.0
    %2030 = vmatpush1.xpose.msra.mxu0 0.0
    %2031 = vmatprep.subr.mxu0 0.0
    %2032 = vmatpush1.xpose.msra.mxu0 0.0
    %2033 = vmatprep.subr.mxu0 0.0
    %2034 = vmatpush1.xpose.msra.mxu0 0.0
    %2035 = vmatprep.subr.mxu0 0.0
    %2036 = vmatpush1.xpose.msra.mxu0 0.0
    %2037 = vmatprep.mubr.f32.mxu0 %v1093
    %2038 = vmatmul.mubr.f32.gmra.mrb[0].mxu0 %v1085
    %v2039 = vpop.f32.mrb[0].mxu0
    %v2040 = vadd.f32 %v1970, %v2039
    %v2041 = vpop.f32.mrb[0].mxu0
    %2042 = vdwg.mxu0
    %2043 = vmatprep.subr.mxu0 %v928
    %2044 = vmatpush1.xpose.msra.mxu0 %v927
    %2045 = vmatprep.subr.mxu0 %v958
    %2046 = vmatpush1.xpose.msra.mxu0 %v957
    %2047 = vmatprep.subr.mxu0 0.0
    %2048 = vmatpush1.xpose.msra.mxu0 0.0
    %2049 = vmatprep.subr.mxu0 0.0
    %2050 = vmatpush1.xpose.msra.mxu0 0.0
    %2051 = vmatprep.subr.mxu0 0.0
    %2052 = vmatpush1.xpose.msra.mxu0 0.0
    %2053 = vmatprep.subr.mxu0 0.0
    %2054 = vmatpush1.xpose.msra.mxu0 0.0
    %2055 = vmatprep.subr.mxu0 0.0
    %2056 = vmatpush1.xpose.msra.mxu0 0.0
    %2057 = vmatprep.subr.mxu0 0.0
    %2058 = vmatpush1.xpose.msra.mxu0 0.0
    %2059 = vmatprep.subr.mxu0 0.0
    %2060 = vmatpush1.xpose.msra.mxu0 0.0
    %2061 = vmatprep.subr.mxu0 0.0
    %2062 = vmatpush1.xpose.msra.mxu0 0.0
    %2063 = vmatprep.subr.mxu0 0.0
    %2064 = vmatpush1.xpose.msra.mxu0 0.0
    %2065 = vmatprep.subr.mxu0 0.0
    %2066 = vmatpush1.xpose.msra.mxu0 0.0
    %2067 = vmatprep.subr.mxu0 0.0
    %2068 = vmatpush1.xpose.msra.mxu0 0.0
    %2069 = vmatprep.subr.mxu0 0.0
    %2070 = vmatpush1.xpose.msra.mxu0 0.0
    %2071 = vmatprep.subr.mxu0 0.0
    %2072 = vmatpush1.xpose.msra.mxu0 0.0
    %2073 = vmatprep.subr.mxu0 0.0
    %2074 = vmatpush1.xpose.msra.mxu0 0.0
    %2075 = vmatprep.subr.mxu0 0.0
    %2076 = vmatpush1.xpose.msra.mxu0 0.0
    %2077 = vmatprep.subr.mxu0 0.0
    %2078 = vmatpush1.xpose.msra.mxu0 0.0
    %2079 = vmatprep.subr.mxu0 0.0
    %2080 = vmatpush1.xpose.msra.mxu0 0.0
    %2081 = vmatprep.subr.mxu0 0.0
    %2082 = vmatpush1.xpose.msra.mxu0 0.0
    %2083 = vmatprep.subr.mxu0 0.0
    %2084 = vmatpush1.xpose.msra.mxu0 0.0
    %2085 = vmatprep.subr.mxu0 0.0
    %2086 = vmatpush1.xpose.msra.mxu0 0.0
    %2087 = vmatprep.subr.mxu0 0.0
    %2088 = vmatpush1.xpose.msra.mxu0 0.0
    %2089 = vmatprep.subr.mxu0 0.0
    %2090 = vmatpush1.xpose.msra.mxu0 0.0
    %2091 = vmatprep.subr.mxu0 0.0
    %2092 = vmatpush1.xpose.msra.mxu0 0.0
    %2093 = vmatprep.subr.mxu0 0.0
    %2094 = vmatpush1.xpose.msra.mxu0 0.0
    %2095 = vmatprep.subr.mxu0 0.0
    %2096 = vmatpush1.xpose.msra.mxu0 0.0
    %2097 = vmatprep.subr.mxu0 0.0
    %2098 = vmatpush1.xpose.msra.mxu0 0.0
    %2099 = vmatprep.subr.mxu0 0.0
    %2100 = vmatpush1.xpose.msra.mxu0 0.0
    %2101 = vmatprep.subr.mxu0 0.0
    %2102 = vmatpush1.xpose.msra.mxu0 0.0
    %2103 = vmatprep.subr.mxu0 0.0
    %2104 = vmatpush1.xpose.msra.mxu0 0.0
    %2105 = vmatprep.subr.mxu0 0.0
    %2106 = vmatpush1.xpose.msra.mxu0 0.0
    %2107 = vmatprep.mubr.f32.mxu0 %v1094
    %2108 = vmatmul.mubr.f32.gmra.mrb[0].mxu0 %v1092
    %v2109 = vpop.f32.mrb[0].mxu0
    %v2110 = vadd.f32 %v2040, %v2109
    %v2111 = vpop.f32.mrb[0].mxu0
    %2112 = vdwg.mxu0
    %2113 = vmatprep.subr.mxu0 %v930
    %2114 = vmatpush1.xpose.msra.mxu0 %v929
    %2115 = vmatprep.subr.mxu0 %v960
    %2116 = vmatpush1.xpose.msra.mxu0 %v959
    %2117 = vmatprep.subr.mxu0 0.0
    %2118 = vmatpush1.xpose.msra.mxu0 0.0
    %2119 = vmatprep.subr.mxu0 0.0
    %2120 = vmatpush1.xpose.msra.mxu0 0.0
    %2121 = vmatprep.subr.mxu0 0.0
    %2122 = vmatpush1.xpose.msra.mxu0 0.0
    %2123 = vmatprep.subr.mxu0 0.0
    %2124 = vmatpush1.xpose.msra.mxu0 0.0
    %2125 = vmatprep.subr.mxu0 0.0
    %2126 = vmatpush1.xpose.msra.mxu0 0.0
    %2127 = vmatprep.subr.mxu0 0.0
    %2128 = vmatpush1.xpose.msra.mxu0 0.0
    %2129 = vmatprep.subr.mxu0 0.0
    %2130 = vmatpush1.xpose.msra.mxu0 0.0
    %2131 = vmatprep.subr.mxu0 0.0
    %2132 = vmatpush1.xpose.msra.mxu0 0.0
    %2133 = vmatprep.subr.mxu0 0.0
    %2134 = vmatpush1.xpose.msra.mxu0 0.0
    %2135 = vmatprep.subr.mxu0 0.0
    %2136 = vmatpush1.xpose.msra.mxu0 0.0
    %2137 = vmatprep.subr.mxu0 0.0
    %2138 = vmatpush1.xpose.msra.mxu0 0.0
    %2139 = vmatprep.subr.mxu0 0.0
    %2140 = vmatpush1.xpose.msra.mxu0 0.0
    %2141 = vmatprep.subr.mxu0 0.0
    %2142 = vmatpush1.xpose.msra.mxu0 0.0
    %2143 = vmatprep.subr.mxu0 0.0
    %2144 = vmatpush1.xpose.msra.mxu0 0.0
    %2145 = vmatprep.subr.mxu0 0.0
    %2146 = vmatpush1.xpose.msra.mxu0 0.0
    %2147 = vmatprep.subr.mxu0 0.0
    %2148 = vmatpush1.xpose.msra.mxu0 0.0
    %2149 = vmatprep.subr.mxu0 0.0
    %2150 = vmatpush1.xpose.msra.mxu0 0.0
    %2151 = vmatprep.subr.mxu0 0.0
    %2152 = vmatpush1.xpose.msra.mxu0 0.0
    %2153 = vmatprep.subr.mxu0 0.0
    %2154 = vmatpush1.xpose.msra.mxu0 0.0
    %2155 = vmatprep.subr.mxu0 0.0
    %2156 = vmatpush1.xpose.msra.mxu0 0.0
    %2157 = vmatprep.subr.mxu0 0.0
    %2158 = vmatpush1.xpose.msra.mxu0 0.0
    %2159 = vmatprep.subr.mxu0 0.0
    %2160 = vmatpush1.xpose.msra.mxu0 0.0
    %2161 = vmatprep.subr.mxu0 0.0
    %2162 = vmatpush1.xpose.msra.mxu0 0.0
    %2163 = vmatprep.subr.mxu0 0.0
    %2164 = vmatpush1.xpose.msra.mxu0 0.0
    %2165 = vmatprep.subr.mxu0 0.0
    %2166 = vmatpush1.xpose.msra.mxu0 0.0
    %2167 = vmatprep.subr.mxu0 0.0
    %2168 = vmatpush1.xpose.msra.mxu0 0.0
    %2169 = vmatprep.subr.mxu0 0.0
    %2170 = vmatpush1.xpose.msra.mxu0 0.0
    %2171 = vmatprep.subr.mxu0 0.0
    %2172 = vmatpush1.xpose.msra.mxu0 0.0
    %2173 = vmatprep.subr.mxu0 0.0
    %2174 = vmatpush1.xpose.msra.mxu0 0.0
    %2175 = vmatprep.subr.mxu0 0.0
    %2176 = vmatpush1.xpose.msra.mxu0 0.0
    %2177 = vmatprep.mubr.f32.mxu0 %v1102
    %2178 = vmatmul.mubr.f32.gmra.mrb[0].mxu0 %v1101
    %v2179 = vpop.f32.mrb[0].mxu0
    %v2180 = vadd.f32 %v2110, %v2179
    %v2181 = vpop.f32.mrb[0].mxu0
    %2182 = vdwg.mxu0
    %vm2183 = vcmask 74752
    %2184 = vst.msk [vmem:[#allocation10] sm:$0x3] %vm2183, %v2180
    // Predicated region
    $region34: #{model_forward.1} parent=1 // pred_check
      _
    $region35: #{model_forward.1} parent=1 // pred_check_branch
      %2186 = sbr.rel (0) target = $region37
    $region36: #{model_forward.1} parent=1 // pred_region
      %s2188 = ssub.s32 32, 32
      %2189 = vsyncadd [#allocation5], %s2188
      %s2191 = sshll.u32 [#allocation10], 4
      %s2192 = int_to_ptr.vmem [resolvable:$true] %s2191
      %2194 = dma.vmem_to_hbm [thread:$0]  %s2192, 32, %s5, [#allocation5]
    $region37: #{model_forward.1} parent=1 // pred_fallthru
      _
    // Predicated region
    $region38: #{model_forward.1} parent=1 // pred_check
      _
    $region39: #{model_forward.1} parent=1 // pred_check_branch
      %2196 = sbr.rel (0) target = $region41
    $region40: #{model_forward.1} parent=1 // pred_region
      %2197 = dma.done [#allocation5], 32
    $region41: #{model_forward.1} parent=1 // pred_fallthru
      _
    %2198 = vsyncpa [#allocation4], 1
    %2199 = vsyncpa [#allocation5], 1
    %2200 = vsyncpa [#allocation6], 1
    %2201 = vsyncpa [#allocation8], 1

</llo_original>
